<compile_context>
chip_gen: v6e
topology: v6e:2x2x1
jax: 0.10.0
libtpu: 0.0.40
codegen_flags: <defaults>
</compile_context>

<pallas_src>
import functools

import jax
import jax.numpy as jnp
from jax.experimental import pallas as pl
from jax.experimental.pallas import tpu as pltpu


def _round_up(x, m):
    return (x + m - 1) // m * m


# ---------------------------------------------------------------------------
# Fused ConvBlock kernel: one (batch, row-strip) per grid step
# ---------------------------------------------------------------------------
def _conv_block_kernel(*refs, K, W, L, tile_h, LPAD, is_residual, mxu_dtype):
    """L x (depthwise KxK + pointwise 1x1 [+ ReLU]) + residual + final ReLU.

    refs (in order):
      x_rows_hbm : (B, H + 2*halo, W, Cp)  row-padded input, pl.ANY (manual DMA)
      dw_ref     : (L, K, K, Cp)           depthwise weights
      pw_ref     : (L, Cp, Cp)             pointwise weights (mxu_dtype)
      pb_ref     : (L, 1, Cp)              fused bias (dw_b @ pw_w + pw_b), f32
      [xres_ref] : (1, tile_h, W, Cp)      residual input strip (if is_residual)
      o_ref      : (1, tile_h, W, Cp)
      pad_buf    : (ext_h, Wb, Cp) VMEM scratch (zero column halos = SAME pad)
      dma_sem    : DMA semaphore
    """
    if is_residual:
        (x_rows_hbm, dw_ref, pw_ref, pb_ref, xres_ref,
         o_ref, pad_buf, dma_sem) = refs
    else:
        (x_rows_hbm, dw_ref, pw_ref, pb_ref,
         o_ref, pad_buf, dma_sem) = refs
        xres_ref = None

    f32 = jnp.float32
    pad = K // 2
    ext_h, Wb, cp = pad_buf.shape
    b = pl.program_id(0)
    s = pl.program_id(1)
    n_strips = pl.num_programs(1)

    # ---- fetch this strip's halo'd input window straight into the scratch ----
    # Rows are pre-padded by halo zeros on the host, so the window is always
    # in bounds with a static size.
    row0 = pl.multiple_of(s * tile_h, tile_h)
    copy = pltpu.make_async_copy(
        x_rows_hbm.at[b, pl.ds(row0, ext_h), :, :],
        pad_buf.at[:, LPAD:LPAD + W, :],
        dma_sem)
    copy.start()

    # Zero ONLY the left/right column halo strips (never written by any layer;
    # disjoint from the DMA window, so this overlaps with the DMA).  Done every
    # step -> safe under megacore sharding (scratch is per-TensorCore).
    if LPAD > 0:
        pad_buf[:, :LPAD, :] = jnp.zeros((ext_h, LPAD, cp), pad_buf.dtype)
    rpad = Wb - LPAD - W
    if rpad > 0:
        pad_buf[:, LPAD + W:, :] = jnp.zeros((ext_h, rpad, cp), pad_buf.dtype)

    copy.wait()

    # ---- L fused depthwise-separable layers; activations stay in VMEM ----
    for l in range(L):                      # static unroll over the block layers
        in_off = l * pad                    # valid-region shrinks by pad/layer
        out_off = (l + 1) * pad
        out_rows = ext_h - 2 * (l + 1) * pad

        dw_l = dw_ref[l]                    # (K, K, Cp)

        # Depthwise KxK: shift-and-accumulate taps sliced straight from the
        # scratch ref (all offsets are static Python ints).
        acc = jnp.zeros((out_rows, W, cp), pad_buf.dtype)
        for dy in range(K):
            for dx in range(K):
                c0 = LPAD - pad + dx
                tap = pad_buf[in_off + dy:in_off + dy + out_rows, c0:c0 + W, :]
                acc = acc + tap * dw_l[dy, dx]

        # Pointwise 1x1 == channel matmul on the MXU.  bf16 inputs by default,
        # f32 accumulation.  W % 8 == 0 keeps the reshape layout-free.
        y = jnp.dot(acc.reshape(out_rows * W, cp).astype(mxu_dtype),
                    pw_ref[l],
                    preferred_element_type=f32)
        y = y + pb_ref[l].astype(f32)       # fused (depthwise+pointwise) bias

        if l != L - 1:
            y = jnp.maximum(y, 0.0).reshape(out_rows, W, cp)
            pad_buf[out_off:out_off + out_rows, LPAD:LPAD + W, :] = (
                y.astype(pad_buf.dtype))
            # SAME padding between fused layers: rows of this layer's output
            # that fall outside the image (edge strips only) must be zero when
            # the next layer reads them.  Exactly `guard` rows per edge.
            guard = (L - 1 - l) * pad
            if guard > 0:
                zeros_g = jnp.zeros((guard, W, cp), pad_buf.dtype)

                @pl.when(s == 0)
                def _zero_top():
                    pad_buf[out_off:out_off + guard, LPAD:LPAD + W, :] = zeros_g

                @pl.when(s == n_strips - 1)
                def _zero_bot():
                    pad_buf[out_off + out_rows - guard:out_off + out_rows,
                            LPAD:LPAD + W, :] = zeros_g
        else:
            if is_residual:
                y = y + xres_ref[0].astype(f32).reshape(out_rows * W, cp)
            y = jnp.maximum(y, 0.0)
            o_ref[0] = y.reshape(out_rows, W, cp).astype(o_ref.dtype)


# ---------------------------------------------------------------------------
# Wrapper (PyTorch-compatible NCHW interface)
# ---------------------------------------------------------------------------
def conv_block_forward(x_nchw, params, *, kernel_size, is_residual,
                       tile_h=8,
                       mxu_dtype=jnp.bfloat16,       # MXU is bf16-native on v5e/v6e/v7x
                       depthwise_dtype=jnp.float32):  # set bf16 on v6e/v7x for ~2x VALU
    """Forward pass of ConvBlock.

    params: list of (dw_w (K,K,Cin), dw_b (Cin,), pw_w (Cin,Cout), pw_b (Cout,)).
    """
    assert kernel_size % 2 == 1, "SAME semantics match PyTorch only for odd K"
    B, C, H, W = x_nchw.shape
    assert W % 8 == 0, "W must be a multiple of 8 (layout-free reshape before MXU)"
    K = kernel_size
    pad = K // 2
    L = len(params)
    halo = L * pad                     # input rows of context needed per strip side

    # Lane-dense channel padding: all layers share one padded width Cp (>=128).
    c_all = [C] + [p[2].shape[1] for p in params]
    Cp = max(128, _round_up(max(c_all), 128))
    cout_last = params[-1][2].shape[1]
    if is_residual:
        assert cout_last == C, "residual block requires Cout == Cin"

    dw_ws = jnp.zeros((L, K, K, Cp), jnp.float32)
    pw_ws = jnp.zeros((L, Cp, Cp), jnp.float32)
    pb_fs = jnp.zeros((L, 1, Cp), jnp.float32)
    for l, (dw_w, dw_b, pw_w, pw_b) in enumerate(params):
        cin, cout = pw_w.shape
        dw_ws = dw_ws.at[l, :, :, :cin].set(dw_w)
        pw_ws = pw_ws.at[l, :cin, :cout].set(pw_w)
        # Fold depthwise bias into pointwise bias (exact, pointwise is linear).
        pb_fs = pb_fs.at[l, 0, :cout].set(dw_b @ pw_w + pw_b)
    dw_ws = dw_ws.astype(depthwise_dtype)
    pw_ws = pw_ws.astype(mxu_dtype)

    # Row-strip tiling: pick the largest tile_h <= requested that divides H.
    tile_h = max(1, min(tile_h, H))
    while H % tile_h:
        tile_h -= 1
    n_strips = H // tile_h
    ext_h = tile_h + 2 * halo          # strip rows incl. fused-layer halo

    # NCHW -> NHWC (channels on the lane axis), zero-pad channels to Cp.
    x = jnp.transpose(x_nchw, (0, 2, 3, 1))
    x = jnp.pad(x, ((0, 0), (0, 0), (0, 0), (0, Cp - C))).astype(depthwise_dtype)
    # Row-pad by `halo` zeros so every strip's DMA window is statically sized
    # and in bounds (the zeros also provide the vertical SAME padding).
    x_rows = jnp.pad(x, ((0, 0), (halo, halo), (0, 0), (0, 0)))

    # Sublane-aligned column halo; Wb rounded up to a sublane multiple.
    packing = 4 // jnp.dtype(depthwise_dtype).itemsize
    sub = 8 * packing
    LPAD = _round_up(pad, sub) if pad > 0 else 0
    Wb = LPAD + _round_up(W + pad, sub)

    # Explicit scoped-VMEM budget (blocks + scratch + compiler temps, headroom),
    # capped at v7x's 64 MiB physical VMEM.
    it_in = jnp.dtype(depthwise_dtype).itemsize
    it_mx = jnp.dtype(mxu_dtype).itemsize
    est = (ext_h * Wb * Cp * it_in
           + 2 * (L * K * K * Cp * it_in + L * Cp * Cp * it_mx + L * Cp * 4)
           + 2 * tile_h * W * Cp * 4
           + (2 * tile_h * W * Cp * it_in if is_residual else 0)
           + 6 * ext_h * W * Cp * 4)
    vmem_limit = int(min(max(2 * est, 32 << 20), 64 << 20))

    kernel = functools.partial(
        _conv_block_kernel, K=K, W=W, L=L, tile_h=tile_h, LPAD=LPAD,
        is_residual=is_residual, mxu_dtype=mxu_dtype)

    in_specs = [
        pl.BlockSpec(memory_space=pl.ANY),                       # halo'd input (manual DMA)
        pl.BlockSpec((L, K, K, Cp), lambda b, s: (0, 0, 0, 0)),  # depthwise weights
        pl.BlockSpec((L, Cp, Cp), lambda b, s: (0, 0, 0)),       # pointwise weights
        pl.BlockSpec((L, 1, Cp), lambda b, s: (0, 0, 0)),        # fused bias
    ]
    inputs = [x_rows, dw_ws, pw_ws, pb_fs]
    if is_residual:
        in_specs.append(pl.BlockSpec((1, tile_h, W, Cp), lambda b, s: (b, s, 0, 0)))
        inputs.append(x)

    out = pl.pallas_call(
        kernel,
        out_shape=jax.ShapeDtypeStruct((B, H, W, Cp), jnp.float32),
        grid=(B, n_strips),
        in_specs=in_specs,
        out_specs=pl.BlockSpec((1, tile_h, W, Cp), lambda b, s: (b, s, 0, 0)),
        scratch_shapes=[
            pltpu.VMEM((ext_h, Wb, Cp), depthwise_dtype),
            pltpu.SemaphoreType.DMA,
        ],
        compiler_params=pltpu.CompilerParams(
            dimension_semantics=("parallel", "parallel"),
            vmem_limit_bytes=vmem_limit),
    )(*inputs)

    # Drop padded channels, back to NCHW for the PyTorch-compatible interface.
    out = out[..., :cout_last]
    return jnp.transpose(out, (0, 3, 1, 2))


# ---------------------------------------------------------------------------
# Parameter init (mimics PyTorch Conv2d default uniform +-1/sqrt(fan_in))
# ---------------------------------------------------------------------------
def init_conv_block_params(key, num_input_channels, num_filters, kernel_size,
                           num_convolutions_per_block):
    params = []
    cin = num_input_channels
    for _ in range(num_convolutions_per_block):
        cout = num_filters
        key, k1, k2, k3, k4 = jax.random.split(key, 5)
        bound_dw = 1.0 / (kernel_size * kernel_size) ** 0.5   # depthwise fan_in
        dw_w = jax.random.uniform(k1, (kernel_size, kernel_size, cin),
                                  jnp.float32, -bound_dw, bound_dw)
        dw_b = jax.random.uniform(k2, (cin,), jnp.float32, -bound_dw, bound_dw)
        bound_pw = 1.0 / cin ** 0.5                            # pointwise fan_in
        pw_w = jax.random.uniform(k3, (cin, cout), jnp.float32,
                                  -bound_pw, bound_pw)
        pw_b = jax.random.uniform(k4, (cout,), jnp.float32,
                                  -bound_pw, bound_pw)
        params.append((dw_w, dw_b, pw_w, pw_b))
        cin = cout
    return params


# ---------------------------------------------------------------------------
# Reference (plain JAX) for correctness check
# ---------------------------------------------------------------------------
def _ref_forward(x_nchw, params, *, kernel_size, is_residual):
    x = jnp.transpose(x_nchw, (0, 2, 3, 1))
    inp = x
    K = kernel_size
    pad = K // 2
    n_layers = len(params)
    for i, (dw_w, dw_b, pw_w, pw_b) in enumerate(params):
        B, H, W, C = x.shape
        xp = jnp.pad(x, ((0, 0), (pad, pad), (pad, pad), (0, 0)))
        acc = jnp.zeros((B, H, W, C), jnp.float32)
        for dy in range(K):
            for dx in range(K):
                acc = acc + xp[:, dy:dy + H, dx:dx + W, :] * dw_w[dy, dx, :]
        acc = acc + dw_b
        y = jnp.einsum('bhwc,cf->bhwf', acc, pw_w) + pw_b
        if i != n_layers - 1:
            y = jnp.maximum(y, 0.0)
        x = y
    if is_residual:
        x = x + inp
    x = jnp.maximum(x, 0.0)
    return jnp.transpose(x, (0, 3, 1, 2))


if __name__ == "__main__":
    # Small config: residual block => num_filters == input channels.
    B, C, H, W = 2, 4, 16, 16
    kernel_size = 3
    num_filters = 4
    num_convs = 2
    is_residual = True

    key = jax.random.PRNGKey(0)
    kx, kp = jax.random.split(key)
    x = jax.random.normal(kx, (B, C, H, W), jnp.float32)
    params = init_conv_block_params(kp, C, num_filters, kernel_size, num_convs)

    ref = _ref_forward(x, params, kernel_size=kernel_size,
                       is_residual=is_residual)

    # 1) Exact-parity config (all f32, MXU included): tight tolerance.
    out_f32 = conv_block_forward(
        x, params, kernel_size=kernel_size, is_residual=is_residual,
        tile_h=8, mxu_dtype=jnp.float32, depthwise_dtype=jnp.float32)
    out_f32 = jax.block_until_ready(out_f32)
    assert out_f32.shape == (B, num_filters, H, W)
    assert jnp.allclose(out_f32, ref, atol=1e-4, rtol=1e-4), \
        "f32 kernel mismatch vs reference"

    # 2) Default perf config: bf16 inputs to the pointwise MXU matmul
    #    (f32 accumulation), f32 depthwise (safe on v5e's VPU).  On v6e/v7x,
    #    pass depthwise_dtype=jnp.bfloat16 as well for ~2x depthwise VALU
    #    throughput and half the scratch VMEM (looser tolerance applies).
    out_bf16 = conv_block_forward(
        x, params, kernel_size=kernel_size, is_residual=is_residual, tile_h=8)
    out_bf16 = jax.block_until_ready(out_bf16)
    assert out_bf16.shape == (B, num_filters, H, W)
    assert jnp.allclose(out_bf16, ref, atol=5e-2, rtol=5e-2), \
        "bf16-MXU kernel mismatch vs reference"

    print("KERNEL_OK")
</pallas_src>

<mosaic_0001>
module attributes {stable_mosaic.version = 11 : i64} {
  func.func @_conv_block_kernel(%arg0: i32, %arg1: i32, %arg2: memref<2x20x16x128xf32, #tpu.memory_space<any>>, %arg3: memref<2x3x3x128xf32, #tpu.memory_space<vmem>>, %arg4: memref<2x128x128xf32, #tpu.memory_space<vmem>>, %arg5: memref<2x1x128xf32, #tpu.memory_space<vmem>>, %arg6: memref<1x8x16x128xf32, #tpu.memory_space<vmem>>, %arg7: memref<1x8x16x128xf32, #tpu.memory_space<vmem>>, %arg8: memref<12x32x128xf32, #tpu.memory_space<vmem>>, %arg9: memref<!tpu.dma_semaphore, #tpu.memory_space<semaphore_mem>>) attributes {dimension_semantics = [#tpu.dimension_semantics<parallel>, #tpu.dimension_semantics<parallel>], iteration_bounds = array<i64: 2, 2>, scalar_prefetch = 0 : i64, scratch_operands = 2 : i64, tpu.core_type = #tpu.core_type<tc>, window_params = [{}, {pipeline_mode = #tpu.pipeline_mode<synchronous>, transform_indices = @transform_1, window_bounds = array<i64: 2, 3, 3, 128>}, {pipeline_mode = #tpu.pipeline_mode<synchronous>, transform_indices = @transform_2, window_bounds = array<i64: 2, 128, 128>}, {pipeline_mode = #tpu.pipeline_mode<synchronous>, transform_indices = @transform_3, window_bounds = array<i64: 2, 1, 128>}, {transform_indices = @transform_4, window_bounds = array<i64: 1, 8, 16, 128>}, {transform_indices = @transform_5, window_bounds = array<i64: 1, 8, 16, 128>}]} {
    %c8_i32 = arith.constant 8 : i32
    %0 = arith.muli %arg1, %c8_i32 : i32
    %1 = tpu.assume_multiple %0, 8 : i32
    %c0_i32 = arith.constant 0 : i32
    %c0_i32_0 = arith.constant 0 : i32
    %2 = tpu.memref_slice %arg2[%arg0, %1, %c0_i32, %c0_i32_0] : memref<2x20x16x128xf32, #tpu.memory_space<any>> -> memref<1x12x16x128xf32, #tpu.memory_space<any>>
    %3 = tpu.memref_squeeze %2 : memref<1x12x16x128xf32, #tpu.memory_space<any>> -> memref<12x16x128xf32, #tpu.memory_space<any>>
    %c0_i32_1 = arith.constant 0 : i32
    %c8_i32_2 = arith.constant 8 : i32
    %c0_i32_3 = arith.constant 0 : i32
    %4 = tpu.memref_slice %arg8[%c0_i32_1, %c8_i32_2, %c0_i32_3] : memref<12x32x128xf32, #tpu.memory_space<vmem>> -> memref<12x16x128xf32, #tpu.memory_space<vmem>>
    tpu.enqueue_dma source(%3 : memref<12x16x128xf32, #tpu.memory_space<any>>) target(%4 : memref<12x16x128xf32, #tpu.memory_space<vmem>>) target_semaphore(%arg9 : memref<!tpu.dma_semaphore, #tpu.memory_space<semaphore_mem>>)
    %cst = arith.constant 0.000000e+00 : f32
    %5 = vector.broadcast %cst : f32 to vector<12x8x128xf32>
    %c0 = arith.constant 0 : index
    %c0_4 = arith.constant 0 : index
    %c0_5 = arith.constant 0 : index
    %6 = vector.load %arg8[%c0, %c0_4, %c0_5] : memref<12x32x128xf32, #tpu.memory_space<vmem>>, vector<12x8x128xf32>
    tpu.vector_store %arg8[%c0, %c0_4, %c0_5], %5 {strides = array<i32>} : memref<12x32x128xf32, #tpu.memory_space<vmem>>, vector<12x8x128xf32>,
    %cst_6 = arith.constant 0.000000e+00 : f32
    %7 = vector.broadcast %cst_6 : f32 to vector<12x8x128xf32>
    %c0_7 = arith.constant 0 : index
    %c24 = arith.constant 24 : index
    %c0_8 = arith.constant 0 : index
    %8 = vector.load %arg8[%c0_7, %c24, %c0_8] : memref<12x32x128xf32, #tpu.memory_space<vmem>>, vector<12x8x128xf32>
    tpu.vector_store %arg8[%c0_7, %c24, %c0_8], %7 {strides = array<i32>} : memref<12x32x128xf32, #tpu.memory_space<vmem>>, vector<12x8x128xf32>,
    %c0_i32_9 = arith.constant 0 : i32
    %c0_i32_10 = arith.constant 0 : i32
    %9 = tpu.memref_slice %arg2[%arg0, %1, %c0_i32_9, %c0_i32_10] : memref<2x20x16x128xf32, #tpu.memory_space<any>> -> memref<1x12x16x128xf32, #tpu.memory_space<any>>
    %10 = tpu.memref_squeeze %9 : memref<1x12x16x128xf32, #tpu.memory_space<any>> -> memref<12x16x128xf32, #tpu.memory_space<any>>
    %c0_i32_11 = arith.constant 0 : i32
    %c8_i32_12 = arith.constant 8 : i32
    %c0_i32_13 = arith.constant 0 : i32
    %11 = tpu.memref_slice %arg8[%c0_i32_11, %c8_i32_12, %c0_i32_13] : memref<12x32x128xf32, #tpu.memory_space<vmem>> -> memref<12x16x128xf32, #tpu.memory_space<vmem>>
    tpu.wait_dma2 semaphore(%arg9 : memref<!tpu.dma_semaphore, #tpu.memory_space<semaphore_mem>>) src(%10 : memref<12x16x128xf32, #tpu.memory_space<any>>) dst(%11 : memref<12x16x128xf32, #tpu.memory_space<vmem>>)
    %c0_14 = arith.constant 0 : index
    %c0_15 = arith.constant 0 : index
    %c0_16 = arith.constant 0 : index
    %c0_17 = arith.constant 0 : index
    %12 = vector.load %arg3[%c0_14, %c0_15, %c0_16, %c0_17] : memref<2x3x3x128xf32, #tpu.memory_space<vmem>>, vector<1x3x3x128xf32>
    %13 = vector.shape_cast %12 : vector<1x3x3x128xf32> to vector<3x3x128xf32>
    %cst_18 = arith.constant 0.000000e+00 : f32
    %14 = vector.broadcast %cst_18 : f32 to vector<10x16x128xf32>
    %c0_19 = arith.constant 0 : index
    %c7 = arith.constant 7 : index
    %c0_20 = arith.constant 0 : index
    %15 = vector.load %arg8[%c0_19, %c7, %c0_20] : memref<12x32x128xf32, #tpu.memory_space<vmem>>, vector<10x16x128xf32>
    %16 = vector.extract_strided_slice %13 {offsets = [0, 0, 0], sizes = [1, 1, 128], strides = [1, 1, 1]} : vector<3x3x128xf32> to vector<1x1x128xf32>
    %17 = vector.shape_cast %16 : vector<1x1x128xf32> to vector<128xf32>
    %18 = vector.shape_cast %17 : vector<128xf32> to vector<1x1x128xf32>
    %19 = vector.broadcast %18 : vector<1x1x128xf32> to vector<10x16x128xf32>
    %20 = arith.mulf %15, %19 : vector<10x16x128xf32>
    %21 = arith.addf %14, %20 : vector<10x16x128xf32>
    %c0_21 = arith.constant 0 : index
    %c8 = arith.constant 8 : index
    %c0_22 = arith.constant 0 : index
    %22 = vector.load %arg8[%c0_21, %c8, %c0_22] : memref<12x32x128xf32, #tpu.memory_space<vmem>>, vector<10x16x128xf32>
    %23 = vector.extract_strided_slice %13 {offsets = [0, 1, 0], sizes = [1, 1, 128], strides = [1, 1, 1]} : vector<3x3x128xf32> to vector<1x1x128xf32>
    %24 = vector.shape_cast %23 : vector<1x1x128xf32> to vector<128xf32>
    %25 = vector.shape_cast %24 : vector<128xf32> to vector<1x1x128xf32>
    %26 = vector.broadcast %25 : vector<1x1x128xf32> to vector<10x16x128xf32>
    %27 = arith.mulf %22, %26 : vector<10x16x128xf32>
    %28 = arith.addf %21, %27 : vector<10x16x128xf32>
    %c0_23 = arith.constant 0 : index
    %c9 = arith.constant 9 : index
    %c0_24 = arith.constant 0 : index
    %29 = vector.load %arg8[%c0_23, %c9, %c0_24] : memref<12x32x128xf32, #tpu.memory_space<vmem>>, vector<10x16x128xf32>
    %30 = vector.extract_strided_slice %13 {offsets = [0, 2, 0], sizes = [1, 1, 128], strides = [1, 1, 1]} : vector<3x3x128xf32> to vector<1x1x128xf32>
    %31 = vector.shape_cast %30 : vector<1x1x128xf32> to vector<128xf32>
    %32 = vector.shape_cast %31 : vector<128xf32> to vector<1x1x128xf32>
    %33 = vector.broadcast %32 : vector<1x1x128xf32> to vector<10x16x128xf32>
    %34 = arith.mulf %29, %33 : vector<10x16x128xf32>
    %35 = arith.addf %28, %34 : vector<10x16x128xf32>
    %c1 = arith.constant 1 : index
    %c7_25 = arith.constant 7 : index
    %c0_26 = arith.constant 0 : index
    %36 = vector.load %arg8[%c1, %c7_25, %c0_26] : memref<12x32x128xf32, #tpu.memory_space<vmem>>, vector<10x16x128xf32>
    %37 = vector.extract_strided_slice %13 {offsets = [1, 0, 0], sizes = [1, 1, 128], strides = [1, 1, 1]} : vector<3x3x128xf32> to vector<1x1x128xf32>
    %38 = vector.shape_cast %37 : vector<1x1x128xf32> to vector<128xf32>
    %39 = vector.shape_cast %38 : vector<128xf32> to vector<1x1x128xf32>
    %40 = vector.broadcast %39 : vector<1x1x128xf32> to vector<10x16x128xf32>
    %41 = arith.mulf %36, %40 : vector<10x16x128xf32>
    %42 = arith.addf %35, %41 : vector<10x16x128xf32>
    %c1_27 = arith.constant 1 : index
    %c8_28 = arith.constant 8 : index
    %c0_29 = arith.constant 0 : index
    %43 = vector.load %arg8[%c1_27, %c8_28, %c0_29] : memref<12x32x128xf32, #tpu.memory_space<vmem>>, vector<10x16x128xf32>
    %44 = vector.extract_strided_slice %13 {offsets = [1, 1, 0], sizes = [1, 1, 128], strides = [1, 1, 1]} : vector<3x3x128xf32> to vector<1x1x128xf32>
    %45 = vector.shape_cast %44 : vector<1x1x128xf32> to vector<128xf32>
    %46 = vector.shape_cast %45 : vector<128xf32> to vector<1x1x128xf32>
    %47 = vector.broadcast %46 : vector<1x1x128xf32> to vector<10x16x128xf32>
    %48 = arith.mulf %43, %47 : vector<10x16x128xf32>
    %49 = arith.addf %42, %48 : vector<10x16x128xf32>
    %c1_30 = arith.constant 1 : index
    %c9_31 = arith.constant 9 : index
    %c0_32 = arith.constant 0 : index
    %50 = vector.load %arg8[%c1_30, %c9_31, %c0_32] : memref<12x32x128xf32, #tpu.memory_space<vmem>>, vector<10x16x128xf32>
    %51 = vector.extract_strided_slice %13 {offsets = [1, 2, 0], sizes = [1, 1, 128], strides = [1, 1, 1]} : vector<3x3x128xf32> to vector<1x1x128xf32>
    %52 = vector.shape_cast %51 : vector<1x1x128xf32> to vector<128xf32>
    %53 = vector.shape_cast %52 : vector<128xf32> to vector<1x1x128xf32>
    %54 = vector.broadcast %53 : vector<1x1x128xf32> to vector<10x16x128xf32>
    %55 = arith.mulf %50, %54 : vector<10x16x128xf32>
    %56 = arith.addf %49, %55 : vector<10x16x128xf32>
    %c2 = arith.constant 2 : index
    %c7_33 = arith.constant 7 : index
    %c0_34 = arith.constant 0 : index
    %57 = vector.load %arg8[%c2, %c7_33, %c0_34] : memref<12x32x128xf32, #tpu.memory_space<vmem>>, vector<10x16x128xf32>
    %58 = vector.extract_strided_slice %13 {offsets = [2, 0, 0], sizes = [1, 1, 128], strides = [1, 1, 1]} : vector<3x3x128xf32> to vector<1x1x128xf32>
    %59 = vector.shape_cast %58 : vector<1x1x128xf32> to vector<128xf32>
    %60 = vector.shape_cast %59 : vector<128xf32> to vector<1x1x128xf32>
    %61 = vector.broadcast %60 : vector<1x1x128xf32> to vector<10x16x128xf32>
    %62 = arith.mulf %57, %61 : vector<10x16x128xf32>
    %63 = arith.addf %56, %62 : vector<10x16x128xf32>
    %c2_35 = arith.constant 2 : index
    %c8_36 = arith.constant 8 : index
    %c0_37 = arith.constant 0 : index
    %64 = vector.load %arg8[%c2_35, %c8_36, %c0_37] : memref<12x32x128xf32, #tpu.memory_space<vmem>>, vector<10x16x128xf32>
    %65 = vector.extract_strided_slice %13 {offsets = [2, 1, 0], sizes = [1, 1, 128], strides = [1, 1, 1]} : vector<3x3x128xf32> to vector<1x1x128xf32>
    %66 = vector.shape_cast %65 : vector<1x1x128xf32> to vector<128xf32>
    %67 = vector.shape_cast %66 : vector<128xf32> to vector<1x1x128xf32>
    %68 = vector.broadcast %67 : vector<1x1x128xf32> to vector<10x16x128xf32>
    %69 = arith.mulf %64, %68 : vector<10x16x128xf32>
    %70 = arith.addf %63, %69 : vector<10x16x128xf32>
    %c2_38 = arith.constant 2 : index
    %c9_39 = arith.constant 9 : index
    %c0_40 = arith.constant 0 : index
    %71 = vector.load %arg8[%c2_38, %c9_39, %c0_40] : memref<12x32x128xf32, #tpu.memory_space<vmem>>, vector<10x16x128xf32>
    %72 = vector.extract_strided_slice %13 {offsets = [2, 2, 0], sizes = [1, 1, 128], strides = [1, 1, 1]} : vector<3x3x128xf32> to vector<1x1x128xf32>
    %73 = vector.shape_cast %72 : vector<1x1x128xf32> to vector<128xf32>
    %74 = vector.shape_cast %73 : vector<128xf32> to vector<1x1x128xf32>
    %75 = vector.broadcast %74 : vector<1x1x128xf32> to vector<10x16x128xf32>
    %76 = arith.mulf %71, %75 : vector<10x16x128xf32>
    %77 = arith.addf %70, %76 : vector<10x16x128xf32>
    %78 = vector.shape_cast %77 : vector<10x16x128xf32> to vector<160x128xf32>
    %c0_41 = arith.constant 0 : index
    %c0_42 = arith.constant 0 : index
    %c0_43 = arith.constant 0 : index
    %79 = vector.load %arg4[%c0_41, %c0_42, %c0_43] : memref<2x128x128xf32, #tpu.memory_space<vmem>>, vector<1x128x128xf32>
    %80 = vector.shape_cast %79 : vector<1x128x128xf32> to vector<128x128xf32>
    %cst_44 = arith.constant dense<0.000000e+00> : vector<160x128xf32>
    %81 = tpu.matmul %78, %80, %cst_44 {dimension_numbers = #tpu.dot_dimension_numbers<[1], [0], [0], [1], [0, 0, 1, 1], [], []>} : vector<160x128xf32>, vector<128x128xf32>, vector<160x128xf32> -> vector<160x128xf32>
    %c0_45 = arith.constant 0 : index
    %c0_46 = arith.constant 0 : index
    %c0_47 = arith.constant 0 : index
    %82 = vector.load %arg5[%c0_45, %c0_46, %c0_47] : memref<2x1x128xf32, #tpu.memory_space<vmem>>, vector<1x1x128xf32>
    %83 = vector.shape_cast %82 : vector<1x1x128xf32> to vector<1x128xf32>
    %84 = vector.broadcast %83 : vector<1x128xf32> to vector<160x128xf32>
    %85 = arith.addf %81, %84 : vector<160x128xf32>
    %cst_48 = arith.constant 0.000000e+00 : f32
    %86 = vector.broadcast %cst_48 : f32 to vector<160x128xf32>
    %87 = arith.maximumf %85, %86 : vector<160x128xf32>
    %88 = vector.shape_cast %87 : vector<160x128xf32> to vector<10x16x128xf32>
    %c1_49 = arith.constant 1 : index
    %c8_50 = arith.constant 8 : index
    %c0_51 = arith.constant 0 : index
    %89 = vector.load %arg8[%c1_49, %c8_50, %c0_51] : memref<12x32x128xf32, #tpu.memory_space<vmem>>, vector<10x16x128xf32>
    tpu.vector_store %arg8[%c1_49, %c8_50, %c0_51], %88 {strides = array<i32>} : memref<12x32x128xf32, #tpu.memory_space<vmem>>, vector<10x16x128xf32>,
    %cst_52 = arith.constant 0.000000e+00 : f32
    %90 = vector.broadcast %cst_52 : f32 to vector<1x16x128xf32>
    %c0_i32_53 = arith.constant 0 : i32
    %91 = arith.cmpi eq, %arg1, %c0_i32_53 : i32
    %92 = arith.extui %91 : i1 to i32
    %c0_i32_54 = arith.constant 0 : i32
    %93 = arith.cmpi ne, %92, %c0_i32_54 : i32
    scf.if %93 {
      %c1_103 = arith.constant 1 : index
      %c8_104 = arith.constant 8 : index
      %c0_105 = arith.constant 0 : index
      %181 = vector.load %arg8[%c1_103, %c8_104, %c0_105] : memref<12x32x128xf32, #tpu.memory_space<vmem>>, vector<1x16x128xf32>
      tpu.vector_store %arg8[%c1_103, %c8_104, %c0_105], %90 {strides = array<i32>} : memref<12x32x128xf32, #tpu.memory_space<vmem>>, vector<1x16x128xf32>,
    } else {
    }
    %c1_i32 = arith.constant 1 : i32
    %94 = arith.cmpi eq, %arg1, %c1_i32 : i32
    %95 = arith.extui %94 : i1 to i32
    %c0_i32_55 = arith.constant 0 : i32
    %96 = arith.cmpi ne, %95, %c0_i32_55 : i32
    scf.if %96 {
      %c10 = arith.constant 10 : index
      %c8_103 = arith.constant 8 : index
      %c0_104 = arith.constant 0 : index
      %181 = vector.load %arg8[%c10, %c8_103, %c0_104] : memref<12x32x128xf32, #tpu.memory_space<vmem>>, vector<1x16x128xf32>
      tpu.vector_store %arg8[%c10, %c8_103, %c0_104], %90 {strides = array<i32>} : memref<12x32x128xf32, #tpu.memory_space<vmem>>, vector<1x16x128xf32>,
    } else {
    }
    %c1_56 = arith.constant 1 : index
    %c0_57 = arith.constant 0 : index
    %c0_58 = arith.constant 0 : index
    %c0_59 = arith.constant 0 : index
    %97 = vector.load %arg3[%c1_56, %c0_57, %c0_58, %c0_59] : memref<2x3x3x128xf32, #tpu.memory_space<vmem>>, vector<1x3x3x128xf32>
    %98 = vector.shape_cast %97 : vector<1x3x3x128xf32> to vector<3x3x128xf32>
    %cst_60 = arith.constant 0.000000e+00 : f32
    %99 = vector.broadcast %cst_60 : f32 to vector<8x16x128xf32>
    %c1_61 = arith.constant 1 : index
    %c7_62 = arith.constant 7 : index
    %c0_63 = arith.constant 0 : index
    %100 = vector.load %arg8[%c1_61, %c7_62, %c0_63] : memref<12x32x128xf32, #tpu.memory_space<vmem>>, vector<8x16x128xf32>
    %101 = vector.extract_strided_slice %98 {offsets = [0, 0, 0], sizes = [1, 1, 128], strides = [1, 1, 1]} : vector<3x3x128xf32> to vector<1x1x128xf32>
    %102 = vector.shape_cast %101 : vector<1x1x128xf32> to vector<128xf32>
    %103 = vector.shape_cast %102 : vector<128xf32> to vector<1x1x128xf32>
    %104 = vector.broadcast %103 : vector<1x1x128xf32> to vector<8x16x128xf32>
    %105 = arith.mulf %100, %104 : vector<8x16x128xf32>
    %106 = arith.addf %99, %105 : vector<8x16x128xf32>
    %c1_64 = arith.constant 1 : index
    %c8_65 = arith.constant 8 : index
    %c0_66 = arith.constant 0 : index
    %107 = vector.load %arg8[%c1_64, %c8_65, %c0_66] : memref<12x32x128xf32, #tpu.memory_space<vmem>>, vector<8x16x128xf32>
    %108 = vector.extract_strided_slice %98 {offsets = [0, 1, 0], sizes = [1, 1, 128], strides = [1, 1, 1]} : vector<3x3x128xf32> to vector<1x1x128xf32>
    %109 = vector.shape_cast %108 : vector<1x1x128xf32> to vector<128xf32>
    %110 = vector.shape_cast %109 : vector<128xf32> to vector<1x1x128xf32>
    %111 = vector.broadcast %110 : vector<1x1x128xf32> to vector<8x16x128xf32>
    %112 = arith.mulf %107, %111 : vector<8x16x128xf32>
    %113 = arith.addf %106, %112 : vector<8x16x128xf32>
    %c1_67 = arith.constant 1 : index
    %c9_68 = arith.constant 9 : index
    %c0_69 = arith.constant 0 : index
    %114 = vector.load %arg8[%c1_67, %c9_68, %c0_69] : memref<12x32x128xf32, #tpu.memory_space<vmem>>, vector<8x16x128xf32>
    %115 = vector.extract_strided_slice %98 {offsets = [0, 2, 0], sizes = [1, 1, 128], strides = [1, 1, 1]} : vector<3x3x128xf32> to vector<1x1x128xf32>
    %116 = vector.shape_cast %115 : vector<1x1x128xf32> to vector<128xf32>
    %117 = vector.shape_cast %116 : vector<128xf32> to vector<1x1x128xf32>
    %118 = vector.broadcast %117 : vector<1x1x128xf32> to vector<8x16x128xf32>
    %119 = arith.mulf %114, %118 : vector<8x16x128xf32>
    %120 = arith.addf %113, %119 : vector<8x16x128xf32>
    %c2_70 = arith.constant 2 : index
    %c7_71 = arith.constant 7 : index
    %c0_72 = arith.constant 0 : index
    %121 = vector.load %arg8[%c2_70, %c7_71, %c0_72] : memref<12x32x128xf32, #tpu.memory_space<vmem>>, vector<8x16x128xf32>
    %122 = vector.extract_strided_slice %98 {offsets = [1, 0, 0], sizes = [1, 1, 128], strides = [1, 1, 1]} : vector<3x3x128xf32> to vector<1x1x128xf32>
    %123 = vector.shape_cast %122 : vector<1x1x128xf32> to vector<128xf32>
    %124 = vector.shape_cast %123 : vector<128xf32> to vector<1x1x128xf32>
    %125 = vector.broadcast %124 : vector<1x1x128xf32> to vector<8x16x128xf32>
    %126 = arith.mulf %121, %125 : vector<8x16x128xf32>
    %127 = arith.addf %120, %126 : vector<8x16x128xf32>
    %c2_73 = arith.constant 2 : index
    %c8_74 = arith.constant 8 : index
    %c0_75 = arith.constant 0 : index
    %128 = vector.load %arg8[%c2_73, %c8_74, %c0_75] : memref<12x32x128xf32, #tpu.memory_space<vmem>>, vector<8x16x128xf32>
    %129 = vector.extract_strided_slice %98 {offsets = [1, 1, 0], sizes = [1, 1, 128], strides = [1, 1, 1]} : vector<3x3x128xf32> to vector<1x1x128xf32>
    %130 = vector.shape_cast %129 : vector<1x1x128xf32> to vector<128xf32>
    %131 = vector.shape_cast %130 : vector<128xf32> to vector<1x1x128xf32>
    %132 = vector.broadcast %131 : vector<1x1x128xf32> to vector<8x16x128xf32>
    %133 = arith.mulf %128, %132 : vector<8x16x128xf32>
    %134 = arith.addf %127, %133 : vector<8x16x128xf32>
    %c2_76 = arith.constant 2 : index
    %c9_77 = arith.constant 9 : index
    %c0_78 = arith.constant 0 : index
    %135 = vector.load %arg8[%c2_76, %c9_77, %c0_78] : memref<12x32x128xf32, #tpu.memory_space<vmem>>, vector<8x16x128xf32>
    %136 = vector.extract_strided_slice %98 {offsets = [1, 2, 0], sizes = [1, 1, 128], strides = [1, 1, 1]} : vector<3x3x128xf32> to vector<1x1x128xf32>
    %137 = vector.shape_cast %136 : vector<1x1x128xf32> to vector<128xf32>
    %138 = vector.shape_cast %137 : vector<128xf32> to vector<1x1x128xf32>
    %139 = vector.broadcast %138 : vector<1x1x128xf32> to vector<8x16x128xf32>
    %140 = arith.mulf %135, %139 : vector<8x16x128xf32>
    %141 = arith.addf %134, %140 : vector<8x16x128xf32>
    %c3 = arith.constant 3 : index
    %c7_79 = arith.constant 7 : index
    %c0_80 = arith.constant 0 : index
    %142 = vector.load %arg8[%c3, %c7_79, %c0_80] : memref<12x32x128xf32, #tpu.memory_space<vmem>>, vector<8x16x128xf32>
    %143 = vector.extract_strided_slice %98 {offsets = [2, 0, 0], sizes = [1, 1, 128], strides = [1, 1, 1]} : vector<3x3x128xf32> to vector<1x1x128xf32>
    %144 = vector.shape_cast %143 : vector<1x1x128xf32> to vector<128xf32>
    %145 = vector.shape_cast %144 : vector<128xf32> to vector<1x1x128xf32>
    %146 = vector.broadcast %145 : vector<1x1x128xf32> to vector<8x16x128xf32>
    %147 = arith.mulf %142, %146 : vector<8x16x128xf32>
    %148 = arith.addf %141, %147 : vector<8x16x128xf32>
    %c3_81 = arith.constant 3 : index
    %c8_82 = arith.constant 8 : index
    %c0_83 = arith.constant 0 : index
    %149 = vector.load %arg8[%c3_81, %c8_82, %c0_83] : memref<12x32x128xf32, #tpu.memory_space<vmem>>, vector<8x16x128xf32>
    %150 = vector.extract_strided_slice %98 {offsets = [2, 1, 0], sizes = [1, 1, 128], strides = [1, 1, 1]} : vector<3x3x128xf32> to vector<1x1x128xf32>
    %151 = vector.shape_cast %150 : vector<1x1x128xf32> to vector<128xf32>
    %152 = vector.shape_cast %151 : vector<128xf32> to vector<1x1x128xf32>
    %153 = vector.broadcast %152 : vector<1x1x128xf32> to vector<8x16x128xf32>
    %154 = arith.mulf %149, %153 : vector<8x16x128xf32>
    %155 = arith.addf %148, %154 : vector<8x16x128xf32>
    %c3_84 = arith.constant 3 : index
    %c9_85 = arith.constant 9 : index
    %c0_86 = arith.constant 0 : index
    %156 = vector.load %arg8[%c3_84, %c9_85, %c0_86] : memref<12x32x128xf32, #tpu.memory_space<vmem>>, vector<8x16x128xf32>
    %157 = vector.extract_strided_slice %98 {offsets = [2, 2, 0], sizes = [1, 1, 128], strides = [1, 1, 1]} : vector<3x3x128xf32> to vector<1x1x128xf32>
    %158 = vector.shape_cast %157 : vector<1x1x128xf32> to vector<128xf32>
    %159 = vector.shape_cast %158 : vector<128xf32> to vector<1x1x128xf32>
    %160 = vector.broadcast %159 : vector<1x1x128xf32> to vector<8x16x128xf32>
    %161 = arith.mulf %156, %160 : vector<8x16x128xf32>
    %162 = arith.addf %155, %161 : vector<8x16x128xf32>
    %163 = vector.shape_cast %162 : vector<8x16x128xf32> to vector<128x128xf32>
    %c1_87 = arith.constant 1 : index
    %c0_88 = arith.constant 0 : index
    %c0_89 = arith.constant 0 : index
    %164 = vector.load %arg4[%c1_87, %c0_88, %c0_89] : memref<2x128x128xf32, #tpu.memory_space<vmem>>, vector<1x128x128xf32>
    %165 = vector.shape_cast %164 : vector<1x128x128xf32> to vector<128x128xf32>
    %cst_90 = arith.constant dense<0.000000e+00> : vector<128x128xf32>
    %166 = tpu.matmul %163, %165, %cst_90 {dimension_numbers = #tpu.dot_dimension_numbers<[1], [0], [0], [1], [0, 0, 1, 1], [], []>} : vector<128x128xf32>, vector<128x128xf32>, vector<128x128xf32> -> vector<128x128xf32>
    %c1_91 = arith.constant 1 : index
    %c0_92 = arith.constant 0 : index
    %c0_93 = arith.constant 0 : index
    %167 = vector.load %arg5[%c1_91, %c0_92, %c0_93] : memref<2x1x128xf32, #tpu.memory_space<vmem>>, vector<1x1x128xf32>
    %168 = vector.shape_cast %167 : vector<1x1x128xf32> to vector<1x128xf32>
    %169 = vector.broadcast %168 : vector<1x128xf32> to vector<128x128xf32>
    %170 = arith.addf %166, %169 : vector<128x128xf32>
    %c0_94 = arith.constant 0 : index
    %c0_95 = arith.constant 0 : index
    %c0_96 = arith.constant 0 : index
    %c0_97 = arith.constant 0 : index
    %171 = vector.load %arg6[%c0_94, %c0_95, %c0_96, %c0_97] : memref<1x8x16x128xf32, #tpu.memory_space<vmem>>, vector<1x8x16x128xf32>
    %172 = vector.shape_cast %171 : vector<1x8x16x128xf32> to vector<8x16x128xf32>
    %173 = vector.shape_cast %172 : vector<8x16x128xf32> to vector<128x128xf32>
    %174 = arith.addf %170, %173 : vector<128x128xf32>
    %cst_98 = arith.constant 0.000000e+00 : f32
    %175 = vector.broadcast %cst_98 : f32 to vector<128x128xf32>
    %176 = arith.maximumf %174, %175 : vector<128x128xf32>
    %177 = vector.shape_cast %176 : vector<128x128xf32> to vector<8x16x128xf32>
    %c0_99 = arith.constant 0 : index
    %c0_100 = arith.constant 0 : index
    %c0_101 = arith.constant 0 : index
    %c0_102 = arith.constant 0 : index
    %178 = vector.load %arg7[%c0_99, %c0_100, %c0_101, %c0_102] : memref<1x8x16x128xf32, #tpu.memory_space<vmem>>, vector<1x8x16x128xf32>
    %179 = vector.shape_cast %178 : vector<1x8x16x128xf32> to vector<8x16x128xf32>
    %180 = vector.shape_cast %177 : vector<8x16x128xf32> to vector<1x8x16x128xf32>
    tpu.vector_store %arg7[%c0_99, %c0_100, %c0_101, %c0_102], %180 {strides = array<i32>} : memref<1x8x16x128xf32, #tpu.memory_space<vmem>>, vector<1x8x16x128xf32>,
    return
  }
  func.func @transform_1(%arg0: i32, %arg1: i32) -> (i32, i32, i32, i32) {
    %c0_i32 = arith.constant 0 : i32
    %c0_i32_0 = arith.constant 0 : i32
    %c0_i32_1 = arith.constant 0 : i32
    %c0_i32_2 = arith.constant 0 : i32
    %c0_i32_3 = arith.constant 0 : i32
    return %c0_i32, %c0_i32_0, %c0_i32_1, %c0_i32_2 : i32, i32, i32, i32
  }
  func.func @transform_2(%arg0: i32, %arg1: i32) -> (i32, i32, i32) {
    %c0_i32 = arith.constant 0 : i32
    %c0_i32_0 = arith.constant 0 : i32
    %c0_i32_1 = arith.constant 0 : i32
    %c0_i32_2 = arith.constant 0 : i32
    return %c0_i32, %c0_i32_0, %c0_i32_1 : i32, i32, i32
  }
  func.func @transform_3(%arg0: i32, %arg1: i32) -> (i32, i32, i32) {
    %c0_i32 = arith.constant 0 : i32
    %c0_i32_0 = arith.constant 0 : i32
    %c0_i32_1 = arith.constant 0 : i32
    %c0_i32_2 = arith.constant 0 : i32
    return %c0_i32, %c0_i32_0, %c0_i32_1 : i32, i32, i32
  }
  func.func @transform_4(%arg0: i32, %arg1: i32) -> (i32, i32, i32, i32) {
    %c0_i32 = arith.constant 0 : i32
    %c0_i32_0 = arith.constant 0 : i32
    %c0_i32_1 = arith.constant 0 : i32
    return %arg0, %arg1, %c0_i32, %c0_i32_0 : i32, i32, i32, i32
  }
  func.func @transform_5(%arg0: i32, %arg1: i32) -> (i32, i32, i32, i32) {
    %c0_i32 = arith.constant 0 : i32
    %c0_i32_0 = arith.constant 0 : i32
    %c0_i32_1 = arith.constant 0 : i32
    return %arg0, %arg1, %c0_i32, %c0_i32_0 : i32, i32, i32, i32
  }
}

</mosaic_0001>

<llo_original>
// kernel: tpu_custom_call.1
$region0: #{tpu_custom_call.1}
  #allocation0 [shape = 'u32[]', space=smem, size = 0x4, offset = 0x4, fixed_abs, tag = 'smem constant byte address 0x4 - core index']
  #allocation1 [shape = 'u32[144,128]{1,0:T(1,128)}', space=vmem, size = 0x12000, scoped, tag = 'internal scratch']
  #allocation2 [shape = 'f32[12,32,128]{2,1,0:T(8,128)}', space=vmem, size = 0x30000, scoped, tag = 'scratch operand']
  #allocation3 [shape = 's32[1]{0}', space=sflag, size = 0x4, scoped, tag = 'scratch operand']
  #allocation10 [shape = 's32[]', space=sflag, size = 0x4, offset = 0, fixed_abs, tag = 'sflag constant byte address 0x0 - dummy sync flag']
  %s0 = inlined_call_operand.hbm [shape: f32[2,20,16,128], index: 0, kind: input, shape index: {}]
  %s1 = inlined_call_operand.vmem [shape: f32[2,3,3,128], index: 1, kind: input, shape index: {}]
  %s2 = inlined_call_operand.hbm [shape: f32[2,128,128], index: 2, kind: input, shape index: {}]
  %s3 = inlined_call_operand.vmem [shape: f32[2,1,128], index: 3, kind: input, shape index: {}]
  %s4 = inlined_call_operand.hbm [shape: f32[2,16,16,128], index: 4, kind: input, shape index: {}]
  %s5 = inlined_call_operand.hbm [shape: f32[2,16,16,128], index: 5, kind: output, shape index: {}]
  %s6 = sld [smem:[#allocation0]]
  $region65: #{tpu_custom_call.1} parent=0
    _
  %s8 = ssub.s32 1, %s6
  %s9 = scalar_select 0, %s8, %s6
  $region1: #{tpu_custom_call.1} parent=0
    #allocation4 [shape = 'u8[131072]{0}', space=vmem, size = 0x20000, scoped, tag = 'input window, operand 2, single buffered']
    #allocation5 [shape = 's32[2]{0}', space=sflag, size = 0x8, scoped, tag = 'scoped memory for tpu_custom_call.1']
    #allocation6 [shape = 's32[2]{0}', space=sflag, size = 0x8, scoped, tag = 'scoped memory for tpu_custom_call.1']
    #allocation7 [shape = 'u8[131072]{0}', space=vmem, size = 0x20000, scoped, tag = 'input window, operand 4']
    #allocation8 [shape = 's32[2]{0}', space=sflag, size = 0x8, scoped, tag = 'scoped memory for tpu_custom_call.1']
    #allocation9 [shape = 'u8[131072]{0}', space=vmem, size = 0x20000, scoped, tag = 'output window, operand 0']
    %10 = vsyncpa [#allocation5], 0
    %11 = vsyncpa [#allocation8], 0
    %s12 = scalar_lea.sflag [#allocation8], 1
    %13 = vsyncpa %s12, 0
    %14 = vsyncpa [#allocation6], 0
    %s15 = scalar_lea.sflag [#allocation6], 1
    %16 = vsyncpa %s15, 0
    loop: start=0, step=1, limit=6
    $region2: #{tpu_custom_call.1} parent=1 // loop_pre_header
      _
    $region3: #{tpu_custom_call.1} parent=1 // loop_header
      %s18 = sphi 0, %s22
      %p19 = scmp.ge.s32.totalorder %s18, 6
      %s25 = sphi 0, %s37
      %s26 = sphi 0, %s33
      %s27 = sphi 0, %s25
      %s28 = sphi 0, %s26
      %s29 = sphi 0, %s27
      %s30 = sphi 0, %s28
      %s38 = sphi 0, %s38
      %s40 = sphi 0, %s38
      %s41 = sphi 0, %s40
      %s55 = sphi 0, %s41
      %s59 = sphi 0, %s59
      %s61 = sphi 0, %s59
      %s62 = sphi 0, %s61
      %s76 = sphi 0, %s62
      %s80 = sphi 0, %s80
      %s82 = sphi 0, %s80
      %s83 = sphi 0, %s82
      %s97 = sphi 0, %s83
      %s105 = sphi 0, %s107
      %s108 = sphi 0, %s105
      %s109 = sphi 0, %s108
      %s125 = sphi 0, %s109
      %s133 = sphi 0, %s135
      %s136 = sphi 0, %s133
      %s137 = sphi 0, %s136
      %s153 = sphi 0, %s137
    $region4: #{tpu_custom_call.1} parent=1 // loop_header_branch
      %21 = sbr.rel (%p19) target = $region8
    $region5: #{tpu_custom_call.1} parent=1 // loop_body
      %s23 = ssub.s32 %s18, 1
      %s24 = ssub.s32 %s18, 2
      %s31 = sadd.s32 1, %s26
      %p32 = scmp.ge.s32.totalorder %s31, 2
      %s33 = scalar_select %p32, 0, %s31
      %s34 = sadd.s32 1, %s25
      %s35 = scalar_select %p32, %s34, %s25
      %p36 = scmp.ge.s32.totalorder %s35, 2
      %s37 = scalar_select %p36, 0, %s35
      %s39 = sadd.s32 %s38, 1
      %p42 = scmp.eq.s32.totalorder %s18, 3
      %p43 = scmp.ne.s32.totalorder %s38, %s40
      %p44 = scmp.eq.s32.totalorder %s18, 0
      %p45 = por %p43, %p44
      %p46 = scmp.ne.s32.totalorder %s38, %s40
      %p47 = scmp.eq.s32.totalorder %s23, 3
      %p48 = por %p46, %p47
      %p49 = scmp.ne.s32.totalorder %s40, %s41
      %p50 = scmp.eq.s32.totalorder %s23, 0
      %p51 = por %p49, %p50
      %p52 = scmp.ne.s32.totalorder %s40, %s41
      %p53 = scmp.eq.s32.totalorder %s24, 3
      %p54 = por %p52, %p53
      %p56 = scmp.ne.s32.totalorder %s41, %s55
      %p57 = scmp.eq.s32.totalorder %s24, 0
      %p58 = por %p56, %p57
      %s60 = sadd.s32 %s59, 1
      %p63 = scmp.eq.s32.totalorder %s18, 3
      %p64 = scmp.ne.s32.totalorder %s59, %s61
      %p65 = scmp.eq.s32.totalorder %s18, 0
      %p66 = por %p64, %p65
      %p67 = scmp.ne.s32.totalorder %s59, %s61
      %p68 = scmp.eq.s32.totalorder %s23, 3
      %p69 = por %p67, %p68
      %p70 = scmp.ne.s32.totalorder %s61, %s62
      %p71 = scmp.eq.s32.totalorder %s23, 0
      %p72 = por %p70, %p71
      %p73 = scmp.ne.s32.totalorder %s61, %s62
      %p74 = scmp.eq.s32.totalorder %s24, 3
      %p75 = por %p73, %p74
      %p77 = scmp.ne.s32.totalorder %s62, %s76
      %p78 = scmp.eq.s32.totalorder %s24, 0
      %p79 = por %p77, %p78
      %s81 = sadd.s32 %s80, 1
      %p84 = scmp.eq.s32.totalorder %s18, 3
      %p85 = scmp.ne.s32.totalorder %s80, %s82
      %p86 = scmp.eq.s32.totalorder %s18, 0
      %p87 = por %p85, %p86
      %p88 = scmp.ne.s32.totalorder %s80, %s82
      %p89 = scmp.eq.s32.totalorder %s23, 3
      %p90 = por %p88, %p89
      %p91 = scmp.ne.s32.totalorder %s82, %s83
      %p92 = scmp.eq.s32.totalorder %s23, 0
      %p93 = por %p91, %p92
      %p94 = scmp.ne.s32.totalorder %s82, %s83
      %p95 = scmp.eq.s32.totalorder %s24, 3
      %p96 = por %p94, %p95
      %p98 = scmp.ne.s32.totalorder %s83, %s97
      %p99 = scmp.eq.s32.totalorder %s24, 0
      %p100 = por %p98, %p99
      %s101 = ssub.s32 %s25, %s37
      %s102 = ssub.s32 %s26, %s33
      %s103 = sor.u32 %s101, %s102
      %p104 = scmp.eq.s32.totalorder %s103, 0
      %s106 = sadd.s32 %s105, 1
      %s107 = scalar_select %p104, %s105, %s106
      %p110 = pneg %p104
      %p111 = scmp.eq.s32.totalorder %s18, 3
      %p112 = por %p110, %p111
      %p113 = scmp.ne.s32.totalorder %s105, %s108
      %p114 = scmp.eq.s32.totalorder %s18, 0
      %p115 = por %p113, %p114
      %p116 = scmp.ne.s32.totalorder %s105, %s108
      %p117 = scmp.eq.s32.totalorder %s23, 3
      %p118 = por %p116, %p117
      %p119 = scmp.ne.s32.totalorder %s108, %s109
      %p120 = scmp.eq.s32.totalorder %s23, 0
      %p121 = por %p119, %p120
      %p122 = scmp.ne.s32.totalorder %s108, %s109
      %p123 = scmp.eq.s32.totalorder %s24, 3
      %p124 = por %p122, %p123
      %p126 = scmp.ne.s32.totalorder %s109, %s125
      %p127 = scmp.eq.s32.totalorder %s24, 0
      %p128 = por %p126, %p127
      %s129 = ssub.s32 %s25, %s37
      %s130 = ssub.s32 %s26, %s33
      %s131 = sor.u32 %s129, %s130
      %p132 = scmp.eq.s32.totalorder %s131, 0
      %s134 = sadd.s32 %s133, 1
      %s135 = scalar_select %p132, %s133, %s134
      %p138 = pneg %p132
      %p139 = scmp.eq.s32.totalorder %s18, 3
      %p140 = por %p138, %p139
      %p141 = scmp.ne.s32.totalorder %s133, %s136
      %p142 = scmp.eq.s32.totalorder %s18, 0
      %p143 = por %p141, %p142
      %p144 = scmp.ne.s32.totalorder %s133, %s136
      %p145 = scmp.eq.s32.totalorder %s23, 3
      %p146 = por %p144, %p145
      %p147 = scmp.ne.s32.totalorder %s136, %s137
      %p148 = scmp.eq.s32.totalorder %s23, 0
      %p149 = por %p147, %p148
      %p150 = scmp.ne.s32.totalorder %s136, %s137
      %p151 = scmp.eq.s32.totalorder %s24, 3
      %p152 = por %p150, %p151
      %p154 = scmp.ne.s32.totalorder %s137, %s153
      %p155 = scmp.eq.s32.totalorder %s24, 0
      %p156 = por %p154, %p155
      %p157 = scmp.le.s32.totalorder 1, %s18
      %p158 = scmp.lt.s32.totalorder %s18, 5
      %p159 = pnand %p157, %p158
      %p160 = pneg %p159
      // Predicated region
      $region9: #{tpu_custom_call.1} parent=5 // pred_check
        _
      $region10: #{tpu_custom_call.1} parent=5 // pred_check_branch
        %162 = sbr.rel (%p159) target = $region12
      $region11: #{tpu_custom_call.1} parent=5 // pred_region
        %s163 = ssub.s32 %s18, 1
        // Predicated region
        $region13: #{tpu_custom_call.1} parent=11 // pred_check
          %p164 = pneg %p51
        $region14: #{tpu_custom_call.1} parent=11 // pred_check_branch
          %166 = sbr.rel (%p164) target = $region16
        $region15: #{tpu_custom_call.1} parent=11 // pred_region
          _
        $region16: #{tpu_custom_call.1} parent=11 // pred_fallthru
          _
        // Predicated region
        $region17: #{tpu_custom_call.1} parent=11 // pred_check
          %p167 = pneg %p72
        $region18: #{tpu_custom_call.1} parent=11 // pred_check_branch
          %169 = sbr.rel (%p167) target = $region20
        $region19: #{tpu_custom_call.1} parent=11 // pred_region
          %s171 = ssub.s32 4096, 4096
          %172 = vsyncadd [#allocation5], %s171
          %s173 = sshll.u32 [#allocation4], 4
          %s174 = int_to_ptr.vmem [resolvable:$true] %s173
          %179 = dma.hbm_to_vmem [thread:$0]  %s2, 4096, %s174, [#allocation5], 128, 128, 8
        $region20: #{tpu_custom_call.1} parent=11 // pred_fallthru
          _
        // Predicated region
        $region21: #{tpu_custom_call.1} parent=11 // pred_check
          %p180 = pneg %p93
        $region22: #{tpu_custom_call.1} parent=11 // pred_check_branch
          %182 = sbr.rel (%p180) target = $region24
        $region23: #{tpu_custom_call.1} parent=11 // pred_region
          _
        $region24: #{tpu_custom_call.1} parent=11 // pred_fallthru
          _
      $region12: #{tpu_custom_call.1} parent=5 // pred_fallthru
        _
      %p183 = scmp.lt.s32.totalorder %s18, 4
      // Predicated region
      $region25: #{tpu_custom_call.1} parent=5 // pred_check
        %p184 = pneg %p183
      $region26: #{tpu_custom_call.1} parent=5 // pred_check_branch
        %186 = sbr.rel (%p184) target = $region28
      $region27: #{tpu_custom_call.1} parent=5 // pred_region
        // Predicated region
        $region29: #{tpu_custom_call.1} parent=27 // pred_check
          %p187 = pneg %p115
        $region30: #{tpu_custom_call.1} parent=27 // pred_check_branch
          %189 = sbr.rel (%p187) target = $region32
        $region31: #{tpu_custom_call.1} parent=27 // pred_region
          %s190 = sand.u32 %s105, 1
          %s191 = scalar_lea.sflag [#allocation8], %s190
          %s192 = sand.u32 %s105, 1
          %s193 = smul.addr %s192, 128
          %s194 = scalar_lea.vmem [#allocation7], %s193
          %s195 = smul.u32 8, %s26
          %s197 = ssub.s32 2048, 2048
          %198 = vsyncadd %s191, %s197
          %s199 = smul.addr %s195, 2
          %s200 = smul.addr %s25, 32
          %s201 = sadd.s32 %s199, %s200
          %s202 = smul.addr %s201, 128
          %s203 = scalar_lea.hbm %s4, %s202
          %s204 = sshll.u32 %s194, 4
          %s205 = int_to_ptr.vmem [resolvable:$true] %s204
          %210 = dma.hbm_to_vmem [thread:$0]  %s203, 2048, %s205, %s191, 128, 128, 8
        $region32: #{tpu_custom_call.1} parent=27 // pred_fallthru
          _
      $region28: #{tpu_custom_call.1} parent=5 // pred_fallthru
        _
      %p211 = scmp.le.s32.totalorder 1, %s18
      %p212 = scmp.lt.s32.totalorder %s18, 5
      %p213 = pnand %p211, %p212
      %p214 = pneg %p213
      // Predicated region
      $region33: #{tpu_custom_call.1} parent=5 // pred_check
        _
      $region34: #{tpu_custom_call.1} parent=5 // pred_check_branch
        %216 = sbr.rel (%p213) target = $region36
      $region35: #{tpu_custom_call.1} parent=5 // pred_region
        %s217 = ssub.s32 %s18, 1
        // Predicated region
        $region37: #{tpu_custom_call.1} parent=35 // pred_check
          %p218 = pneg %p72
        $region38: #{tpu_custom_call.1} parent=35 // pred_check_branch
          %220 = sbr.rel (%p218) target = $region40
        $region39: #{tpu_custom_call.1} parent=35 // pred_region
          %221 = dma.done [#allocation5], 4096
        $region40: #{tpu_custom_call.1} parent=35 // pred_fallthru
          _
        %s222 = sand.u32 %s108, 1
        %s223 = scalar_lea.sflag [#allocation8], %s222
        %s224 = sand.u32 %s108, 1
        %s225 = smul.addr %s224, 128
        %s226 = scalar_lea.vmem [#allocation7], %s225
        // Predicated region
        $region41: #{tpu_custom_call.1} parent=35 // pred_check
          %p227 = pneg %p121
        $region42: #{tpu_custom_call.1} parent=35 // pred_check_branch
          %229 = sbr.rel (%p227) target = $region44
        $region43: #{tpu_custom_call.1} parent=35 // pred_region
          %230 = dma.done %s223, 2048
        $region44: #{tpu_custom_call.1} parent=35 // pred_fallthru
          _
        %p231 = pneg %p51
        %p232 = pneg %p48
        %p233 = pneg %p72
        %p234 = pneg %p69
        %p235 = pneg %p93
        %p236 = pneg %p90
        %s237 = sand.u32 %s108, 1
        %s238 = scalar_lea.sflag [#allocation8], %s237
        %s239 = sand.u32 %s108, 1
        %s240 = smul.addr %s239, 128
        %s241 = scalar_lea.vmem [#allocation7], %s240
        %p242 = pneg %p121
        %p243 = pneg %p118
        %p244 = pneg %p149
        %p245 = pneg %p146
        %s246 = sand.u32 %s136, 1
        %s247 = scalar_lea.sflag [#allocation6], %s246
        %s248 = sand.u32 %s136, 1
        %s249 = smul.addr %s248, 128
        %s250 = scalar_lea.vmem [#allocation9], %s249
        %s251 = smul.u32 8, %s28
        %s252 = smul.u32 8, %s28
        %s253 = smul.u32 %s28, 8
        %s254 = smul.u32 %s253, 16
        %s255 = smul.u32 %s27, 320
        %s256 = sadd.s32 %s254, %s255
        %s257 = smul.addr %s256, 16
        %s258 = scalar_lea.hbm %s0, %s257
        %s259 = scalar_lea.vmem [#allocation2], 8
        %s261 = sshll.u32 %s259, 4
        %s262 = int_to_ptr.vmem [resolvable:$true] %s261
        %264 = dma.hbm_to_vmem [thread:$0]  %s258, 3072, %s262, [#allocation3], 256, 512, 16
        %265 = vst [vmem:[#allocation2] sm:$0xff] 0.0
        %266 = vst [vmem:[#allocation2 + $0x20] sm:$0xff] 0.0
        %267 = vst [vmem:[#allocation2 + $0x40] sm:$0xff] 0.0
        %268 = vst [vmem:[#allocation2 + $0x60] sm:$0xff] 0.0
        %269 = vst [vmem:[#allocation2 + $0x80] sm:$0xff] 0.0
        %270 = vst [vmem:[#allocation2 + $0xa0] sm:$0xff] 0.0
        %271 = vst [vmem:[#allocation2 + $0xc0] sm:$0xff] 0.0
        %272 = vst [vmem:[#allocation2 + $0xe0] sm:$0xff] 0.0
        %273 = vst [vmem:[#allocation2 + $0x100] sm:$0xff] 0.0
        %274 = vst [vmem:[#allocation2 + $0x120] sm:$0xff] 0.0
        %275 = vst [vmem:[#allocation2 + $0x140] sm:$0xff] 0.0
        %276 = vst [vmem:[#allocation2 + $0x160] sm:$0xff] 0.0
        %277 = vst [vmem:[#allocation2 + $0x18] sm:$0xff] 0.0
        %278 = vst [vmem:[#allocation2 + $0x38] sm:$0xff] 0.0
        %279 = vst [vmem:[#allocation2 + $0x58] sm:$0xff] 0.0
        %280 = vst [vmem:[#allocation2 + $0x78] sm:$0xff] 0.0
        %281 = vst [vmem:[#allocation2 + $0x98] sm:$0xff] 0.0
        %282 = vst [vmem:[#allocation2 + $0xb8] sm:$0xff] 0.0
        %283 = vst [vmem:[#allocation2 + $0xd8] sm:$0xff] 0.0
        %284 = vst [vmem:[#allocation2 + $0xf8] sm:$0xff] 0.0
        %285 = vst [vmem:[#allocation2 + $0x118] sm:$0xff] 0.0
        %286 = vst [vmem:[#allocation2 + $0x138] sm:$0xff] 0.0
        %287 = vst [vmem:[#allocation2 + $0x158] sm:$0xff] 0.0
        %288 = vst [vmem:[#allocation2 + $0x178] sm:$0xff] 0.0
        %s289 = smul.u32 12, 16
        %s290 = smul.u32 %s289, 1
        %s291 = sshll.u32 %s290, 4
        %292 = dma.done [#allocation3], %s291
        %v293 = vld [vmem:[%s1] sm:$0x7]
        %v294 = vld [vmem:[%s1 + $0x4] sm:$0x7]
        %v295 = vld [vmem:[%s1 + $0x8] sm:$0x7]
        %v296 = vld [vmem:[#allocation2 + $0x7] sm:$0xff]
        %v297 = vld [vmem:[#allocation2 + $0xf] sm:$0xff]
        %v298 = vld [vmem:[#allocation2 + $0x27] sm:$0xff]
        %v299 = vld [vmem:[#allocation2 + $0x2f] sm:$0xff]
        %v300 = vld [vmem:[#allocation2 + $0x47] sm:$0xff]
        %v301 = vld [vmem:[#allocation2 + $0x4f] sm:$0xff]
        %v302 = vld [vmem:[#allocation2 + $0x67] sm:$0xff]
        %v303 = vld [vmem:[#allocation2 + $0x6f] sm:$0xff]
        %v304 = vld [vmem:[#allocation2 + $0x87] sm:$0xff]
        %v305 = vld [vmem:[#allocation2 + $0x8f] sm:$0xff]
        %v306 = vld [vmem:[#allocation2 + $0xa7] sm:$0xff]
        %v307 = vld [vmem:[#allocation2 + $0xaf] sm:$0xff]
        %v308 = vld [vmem:[#allocation2 + $0xc7] sm:$0xff]
        %v309 = vld [vmem:[#allocation2 + $0xcf] sm:$0xff]
        %v310 = vld [vmem:[#allocation2 + $0xe7] sm:$0xff]
        %v311 = vld [vmem:[#allocation2 + $0xef] sm:$0xff]
        %v312 = vld [vmem:[#allocation2 + $0x107] sm:$0xff]
        %v313 = vld [vmem:[#allocation2 + $0x10f] sm:$0xff]
        %v314 = vld [vmem:[#allocation2 + $0x127] sm:$0xff]
        %v315 = vld [vmem:[#allocation2 + $0x12f] sm:$0xff]
        %v316 = vlaneseq
        %v317 = vshrl.u32 %v316, 7
        %v318 = vsub.s32 0, %v317
        %v319 = vrot.slane %v293, %v318
        %v320 = vmul.f32 %v296, %v319
        %v321 = vmul.f32 %v297, %v319
        %v322 = vmul.f32 %v298, %v319
        %v323 = vmul.f32 %v299, %v319
        %v324 = vmul.f32 %v300, %v319
        %v325 = vmul.f32 %v301, %v319
        %v326 = vmul.f32 %v302, %v319
        %v327 = vmul.f32 %v303, %v319
        %v328 = vmul.f32 %v304, %v319
        %v329 = vmul.f32 %v305, %v319
        %v330 = vmul.f32 %v306, %v319
        %v331 = vmul.f32 %v307, %v319
        %v332 = vmul.f32 %v308, %v319
        %v333 = vmul.f32 %v309, %v319
        %v334 = vmul.f32 %v310, %v319
        %v335 = vmul.f32 %v311, %v319
        %v336 = vmul.f32 %v312, %v319
        %v337 = vmul.f32 %v313, %v319
        %v338 = vmul.f32 %v314, %v319
        %v339 = vmul.f32 %v315, %v319
        %v340 = vadd.f32 %v320, 0.0
        %v341 = vadd.f32 %v321, 0.0
        %v342 = vadd.f32 %v322, 0.0
        %v343 = vadd.f32 %v323, 0.0
        %v344 = vadd.f32 %v324, 0.0
        %v345 = vadd.f32 %v325, 0.0
        %v346 = vadd.f32 %v326, 0.0
        %v347 = vadd.f32 %v327, 0.0
        %v348 = vadd.f32 %v328, 0.0
        %v349 = vadd.f32 %v329, 0.0
        %v350 = vadd.f32 %v330, 0.0
        %v351 = vadd.f32 %v331, 0.0
        %v352 = vadd.f32 %v332, 0.0
        %v353 = vadd.f32 %v333, 0.0
        %v354 = vadd.f32 %v334, 0.0
        %v355 = vadd.f32 %v335, 0.0
        %v356 = vadd.f32 %v336, 0.0
        %v357 = vadd.f32 %v337, 0.0
        %v358 = vadd.f32 %v338, 0.0
        %v359 = vadd.f32 %v339, 0.0
        %v360 = vld [vmem:[#allocation2 + $0x8] sm:$0xff]
        %v361 = vld [vmem:[#allocation2 + $0x10] sm:$0xff]
        %v362 = vld [vmem:[#allocation2 + $0x28] sm:$0xff]
        %v363 = vld [vmem:[#allocation2 + $0x30] sm:$0xff]
        %v364 = vld [vmem:[#allocation2 + $0x48] sm:$0xff]
        %v365 = vld [vmem:[#allocation2 + $0x50] sm:$0xff]
        %v366 = vld [vmem:[#allocation2 + $0x68] sm:$0xff]
        %v367 = vld [vmem:[#allocation2 + $0x70] sm:$0xff]
        %v368 = vld [vmem:[#allocation2 + $0x88] sm:$0xff]
        %v369 = vld [vmem:[#allocation2 + $0x90] sm:$0xff]
        %v370 = vld [vmem:[#allocation2 + $0xa8] sm:$0xff]
        %v371 = vld [vmem:[#allocation2 + $0xb0] sm:$0xff]
        %v372 = vld [vmem:[#allocation2 + $0xc8] sm:$0xff]
        %v373 = vld [vmem:[#allocation2 + $0xd0] sm:$0xff]
        %v374 = vld [vmem:[#allocation2 + $0xe8] sm:$0xff]
        %v375 = vld [vmem:[#allocation2 + $0xf0] sm:$0xff]
        %v376 = vld [vmem:[#allocation2 + $0x108] sm:$0xff]
        %v377 = vld [vmem:[#allocation2 + $0x110] sm:$0xff]
        %v378 = vld [vmem:[#allocation2 + $0x128] sm:$0xff]
        %v379 = vld [vmem:[#allocation2 + $0x130] sm:$0xff]
        %v380 = vlaneseq
        %v381 = vshrl.u32 %v380, 7
        %v382 = vsub.s32 1, %v381
        %v383 = vrot.slane %v293, %v382
        %v384 = vmul.f32 %v360, %v383
        %v385 = vmul.f32 %v361, %v383
        %v386 = vmul.f32 %v362, %v383
        %v387 = vmul.f32 %v363, %v383
        %v388 = vmul.f32 %v364, %v383
        %v389 = vmul.f32 %v365, %v383
        %v390 = vmul.f32 %v366, %v383
        %v391 = vmul.f32 %v367, %v383
        %v392 = vmul.f32 %v368, %v383
        %v393 = vmul.f32 %v369, %v383
        %v394 = vmul.f32 %v370, %v383
        %v395 = vmul.f32 %v371, %v383
        %v396 = vmul.f32 %v372, %v383
        %v397 = vmul.f32 %v373, %v383
        %v398 = vmul.f32 %v374, %v383
        %v399 = vmul.f32 %v375, %v383
        %v400 = vmul.f32 %v376, %v383
        %v401 = vmul.f32 %v377, %v383
        %v402 = vmul.f32 %v378, %v383
        %v403 = vmul.f32 %v379, %v383
        %v404 = vadd.f32 %v340, %v384
        %v405 = vadd.f32 %v341, %v385
        %v406 = vadd.f32 %v342, %v386
        %v407 = vadd.f32 %v343, %v387
        %v408 = vadd.f32 %v344, %v388
        %v409 = vadd.f32 %v345, %v389
        %v410 = vadd.f32 %v346, %v390
        %v411 = vadd.f32 %v347, %v391
        %v412 = vadd.f32 %v348, %v392
        %v413 = vadd.f32 %v349, %v393
        %v414 = vadd.f32 %v350, %v394
        %v415 = vadd.f32 %v351, %v395
        %v416 = vadd.f32 %v352, %v396
        %v417 = vadd.f32 %v353, %v397
        %v418 = vadd.f32 %v354, %v398
        %v419 = vadd.f32 %v355, %v399
        %v420 = vadd.f32 %v356, %v400
        %v421 = vadd.f32 %v357, %v401
        %v422 = vadd.f32 %v358, %v402
        %v423 = vadd.f32 %v359, %v403
        %v424 = vld [vmem:[#allocation2 + $0x9] sm:$0xff]
        %v425 = vld [vmem:[#allocation2 + $0x11] sm:$0xff]
        %v426 = vld [vmem:[#allocation2 + $0x29] sm:$0xff]
        %v427 = vld [vmem:[#allocation2 + $0x31] sm:$0xff]
        %v428 = vld [vmem:[#allocation2 + $0x49] sm:$0xff]
        %v429 = vld [vmem:[#allocation2 + $0x51] sm:$0xff]
        %v430 = vld [vmem:[#allocation2 + $0x69] sm:$0xff]
        %v431 = vld [vmem:[#allocation2 + $0x71] sm:$0xff]
        %v432 = vld [vmem:[#allocation2 + $0x89] sm:$0xff]
        %v433 = vld [vmem:[#allocation2 + $0x91] sm:$0xff]
        %v434 = vld [vmem:[#allocation2 + $0xa9] sm:$0xff]
        %v435 = vld [vmem:[#allocation2 + $0xb1] sm:$0xff]
        %v436 = vld [vmem:[#allocation2 + $0xc9] sm:$0xff]
        %v437 = vld [vmem:[#allocation2 + $0xd1] sm:$0xff]
        %v438 = vld [vmem:[#allocation2 + $0xe9] sm:$0xff]
        %v439 = vld [vmem:[#allocation2 + $0xf1] sm:$0xff]
        %v440 = vld [vmem:[#allocation2 + $0x109] sm:$0xff]
        %v441 = vld [vmem:[#allocation2 + $0x111] sm:$0xff]
        %v442 = vld [vmem:[#allocation2 + $0x129] sm:$0xff]
        %v443 = vld [vmem:[#allocation2 + $0x131] sm:$0xff]
        %v444 = vlaneseq
        %v445 = vshrl.u32 %v444, 7
        %v446 = vsub.s32 2, %v445
        %v447 = vrot.slane %v293, %v446
        %v448 = vmul.f32 %v424, %v447
        %v449 = vmul.f32 %v425, %v447
        %v450 = vmul.f32 %v426, %v447
        %v451 = vmul.f32 %v427, %v447
        %v452 = vmul.f32 %v428, %v447
        %v453 = vmul.f32 %v429, %v447
        %v454 = vmul.f32 %v430, %v447
        %v455 = vmul.f32 %v431, %v447
        %v456 = vmul.f32 %v432, %v447
        %v457 = vmul.f32 %v433, %v447
        %v458 = vmul.f32 %v434, %v447
        %v459 = vmul.f32 %v435, %v447
        %v460 = vmul.f32 %v436, %v447
        %v461 = vmul.f32 %v437, %v447
        %v462 = vmul.f32 %v438, %v447
        %v463 = vmul.f32 %v439, %v447
        %v464 = vmul.f32 %v440, %v447
        %v465 = vmul.f32 %v441, %v447
        %v466 = vmul.f32 %v442, %v447
        %v467 = vmul.f32 %v443, %v447
        %v468 = vadd.f32 %v404, %v448
        %v469 = vadd.f32 %v405, %v449
        %v470 = vadd.f32 %v406, %v450
        %v471 = vadd.f32 %v407, %v451
        %v472 = vadd.f32 %v408, %v452
        %v473 = vadd.f32 %v409, %v453
        %v474 = vadd.f32 %v410, %v454
        %v475 = vadd.f32 %v411, %v455
        %v476 = vadd.f32 %v412, %v456
        %v477 = vadd.f32 %v413, %v457
        %v478 = vadd.f32 %v414, %v458
        %v479 = vadd.f32 %v415, %v459
        %v480 = vadd.f32 %v416, %v460
        %v481 = vadd.f32 %v417, %v461
        %v482 = vadd.f32 %v418, %v462
        %v483 = vadd.f32 %v419, %v463
        %v484 = vadd.f32 %v420, %v464
        %v485 = vadd.f32 %v421, %v465
        %v486 = vadd.f32 %v422, %v466
        %v487 = vadd.f32 %v423, %v467
        %s488 = scalar_lea.vmem [#allocation2], 32
        %v489 = vld [vmem:[%s488 + $0x7] sm:$0xff]
        %v490 = vld [vmem:[%s488 + $0xf] sm:$0xff]
        %v491 = vld [vmem:[%s488 + $0x27] sm:$0xff]
        %v492 = vld [vmem:[%s488 + $0x2f] sm:$0xff]
        %v493 = vld [vmem:[%s488 + $0x47] sm:$0xff]
        %v494 = vld [vmem:[%s488 + $0x4f] sm:$0xff]
        %v495 = vld [vmem:[%s488 + $0x67] sm:$0xff]
        %v496 = vld [vmem:[%s488 + $0x6f] sm:$0xff]
        %v497 = vld [vmem:[%s488 + $0x87] sm:$0xff]
        %v498 = vld [vmem:[%s488 + $0x8f] sm:$0xff]
        %v499 = vld [vmem:[%s488 + $0xa7] sm:$0xff]
        %v500 = vld [vmem:[%s488 + $0xaf] sm:$0xff]
        %v501 = vld [vmem:[%s488 + $0xc7] sm:$0xff]
        %v502 = vld [vmem:[%s488 + $0xcf] sm:$0xff]
        %v503 = vld [vmem:[%s488 + $0xe7] sm:$0xff]
        %v504 = vld [vmem:[%s488 + $0xef] sm:$0xff]
        %v505 = vld [vmem:[%s488 + $0x107] sm:$0xff]
        %v506 = vld [vmem:[%s488 + $0x10f] sm:$0xff]
        %v507 = vld [vmem:[%s488 + $0x127] sm:$0xff]
        %v508 = vld [vmem:[%s488 + $0x12f] sm:$0xff]
        %v509 = vlaneseq
        %v510 = vshrl.u32 %v509, 7
        %v511 = vsub.s32 0, %v510
        %v512 = vrot.slane %v294, %v511
        %v513 = vmul.f32 %v489, %v512
        %v514 = vmul.f32 %v490, %v512
        %v515 = vmul.f32 %v491, %v512
        %v516 = vmul.f32 %v492, %v512
        %v517 = vmul.f32 %v493, %v512
        %v518 = vmul.f32 %v494, %v512
        %v519 = vmul.f32 %v495, %v512
        %v520 = vmul.f32 %v496, %v512
        %v521 = vmul.f32 %v497, %v512
        %v522 = vmul.f32 %v498, %v512
        %v523 = vmul.f32 %v499, %v512
        %v524 = vmul.f32 %v500, %v512
        %v525 = vmul.f32 %v501, %v512
        %v526 = vmul.f32 %v502, %v512
        %v527 = vmul.f32 %v503, %v512
        %v528 = vmul.f32 %v504, %v512
        %v529 = vmul.f32 %v505, %v512
        %v530 = vmul.f32 %v506, %v512
        %v531 = vmul.f32 %v507, %v512
        %v532 = vmul.f32 %v508, %v512
        %v533 = vadd.f32 %v468, %v513
        %v534 = vadd.f32 %v469, %v514
        %v535 = vadd.f32 %v470, %v515
        %v536 = vadd.f32 %v471, %v516
        %v537 = vadd.f32 %v472, %v517
        %v538 = vadd.f32 %v473, %v518
        %v539 = vadd.f32 %v474, %v519
        %v540 = vadd.f32 %v475, %v520
        %v541 = vadd.f32 %v476, %v521
        %v542 = vadd.f32 %v477, %v522
        %v543 = vadd.f32 %v478, %v523
        %v544 = vadd.f32 %v479, %v524
        %v545 = vadd.f32 %v480, %v525
        %v546 = vadd.f32 %v481, %v526
        %v547 = vadd.f32 %v482, %v527
        %v548 = vadd.f32 %v483, %v528
        %v549 = vadd.f32 %v484, %v529
        %v550 = vadd.f32 %v485, %v530
        %v551 = vadd.f32 %v486, %v531
        %v552 = vadd.f32 %v487, %v532
        %v553 = vld [vmem:[%s488 + $0x8] sm:$0xff]
        %v554 = vld [vmem:[%s488 + $0x10] sm:$0xff]
        %v555 = vld [vmem:[%s488 + $0x28] sm:$0xff]
        %v556 = vld [vmem:[%s488 + $0x30] sm:$0xff]
        %v557 = vld [vmem:[%s488 + $0x48] sm:$0xff]
        %v558 = vld [vmem:[%s488 + $0x50] sm:$0xff]
        %v559 = vld [vmem:[%s488 + $0x68] sm:$0xff]
        %v560 = vld [vmem:[%s488 + $0x70] sm:$0xff]
        %v561 = vld [vmem:[%s488 + $0x88] sm:$0xff]
        %v562 = vld [vmem:[%s488 + $0x90] sm:$0xff]
        %v563 = vld [vmem:[%s488 + $0xa8] sm:$0xff]
        %v564 = vld [vmem:[%s488 + $0xb0] sm:$0xff]
        %v565 = vld [vmem:[%s488 + $0xc8] sm:$0xff]
        %v566 = vld [vmem:[%s488 + $0xd0] sm:$0xff]
        %v567 = vld [vmem:[%s488 + $0xe8] sm:$0xff]
        %v568 = vld [vmem:[%s488 + $0xf0] sm:$0xff]
        %v569 = vld [vmem:[%s488 + $0x108] sm:$0xff]
        %v570 = vld [vmem:[%s488 + $0x110] sm:$0xff]
        %v571 = vld [vmem:[%s488 + $0x128] sm:$0xff]
        %v572 = vld [vmem:[%s488 + $0x130] sm:$0xff]
        %v573 = vlaneseq
        %v574 = vshrl.u32 %v573, 7
        %v575 = vsub.s32 1, %v574
        %v576 = vrot.slane %v294, %v575
        %v577 = vmul.f32 %v553, %v576
        %v578 = vmul.f32 %v554, %v576
        %v579 = vmul.f32 %v555, %v576
        %v580 = vmul.f32 %v556, %v576
        %v581 = vmul.f32 %v557, %v576
        %v582 = vmul.f32 %v558, %v576
        %v583 = vmul.f32 %v559, %v576
        %v584 = vmul.f32 %v560, %v576
        %v585 = vmul.f32 %v561, %v576
        %v586 = vmul.f32 %v562, %v576
        %v587 = vmul.f32 %v563, %v576
        %v588 = vmul.f32 %v564, %v576
        %v589 = vmul.f32 %v565, %v576
        %v590 = vmul.f32 %v566, %v576
        %v591 = vmul.f32 %v567, %v576
        %v592 = vmul.f32 %v568, %v576
        %v593 = vmul.f32 %v569, %v576
        %v594 = vmul.f32 %v570, %v576
        %v595 = vmul.f32 %v571, %v576
        %v596 = vmul.f32 %v572, %v576
        %v597 = vadd.f32 %v533, %v577
        %v598 = vadd.f32 %v534, %v578
        %v599 = vadd.f32 %v535, %v579
        %v600 = vadd.f32 %v536, %v580
        %v601 = vadd.f32 %v537, %v581
        %v602 = vadd.f32 %v538, %v582
        %v603 = vadd.f32 %v539, %v583
        %v604 = vadd.f32 %v540, %v584
        %v605 = vadd.f32 %v541, %v585
        %v606 = vadd.f32 %v542, %v586
        %v607 = vadd.f32 %v543, %v587
        %v608 = vadd.f32 %v544, %v588
        %v609 = vadd.f32 %v545, %v589
        %v610 = vadd.f32 %v546, %v590
        %v611 = vadd.f32 %v547, %v591
        %v612 = vadd.f32 %v548, %v592
        %v613 = vadd.f32 %v549, %v593
        %v614 = vadd.f32 %v550, %v594
        %v615 = vadd.f32 %v551, %v595
        %v616 = vadd.f32 %v552, %v596
        %v617 = vld [vmem:[%s488 + $0x9] sm:$0xff]
        %v618 = vld [vmem:[%s488 + $0x11] sm:$0xff]
        %v619 = vld [vmem:[%s488 + $0x29] sm:$0xff]
        %v620 = vld [vmem:[%s488 + $0x31] sm:$0xff]
        %v621 = vld [vmem:[%s488 + $0x49] sm:$0xff]
        %v622 = vld [vmem:[%s488 + $0x51] sm:$0xff]
        %v623 = vld [vmem:[%s488 + $0x69] sm:$0xff]
        %v624 = vld [vmem:[%s488 + $0x71] sm:$0xff]
        %v625 = vld [vmem:[%s488 + $0x89] sm:$0xff]
        %v626 = vld [vmem:[%s488 + $0x91] sm:$0xff]
        %v627 = vld [vmem:[%s488 + $0xa9] sm:$0xff]
        %v628 = vld [vmem:[%s488 + $0xb1] sm:$0xff]
        %v629 = vld [vmem:[%s488 + $0xc9] sm:$0xff]
        %v630 = vld [vmem:[%s488 + $0xd1] sm:$0xff]
        %v631 = vld [vmem:[%s488 + $0xe9] sm:$0xff]
        %v632 = vld [vmem:[%s488 + $0xf1] sm:$0xff]
        %v633 = vld [vmem:[%s488 + $0x109] sm:$0xff]
        %v634 = vld [vmem:[%s488 + $0x111] sm:$0xff]
        %v635 = vld [vmem:[%s488 + $0x129] sm:$0xff]
        %v636 = vld [vmem:[%s488 + $0x131] sm:$0xff]
        %v637 = vlaneseq
        %v638 = vshrl.u32 %v637, 7
        %v639 = vsub.s32 2, %v638
        %v640 = vrot.slane %v294, %v639
        %v641 = vmul.f32 %v617, %v640
        %v642 = vmul.f32 %v618, %v640
        %v643 = vmul.f32 %v619, %v640
        %v644 = vmul.f32 %v620, %v640
        %v645 = vmul.f32 %v621, %v640
        %v646 = vmul.f32 %v622, %v640
        %v647 = vmul.f32 %v623, %v640
        %v648 = vmul.f32 %v624, %v640
        %v649 = vmul.f32 %v625, %v640
        %v650 = vmul.f32 %v626, %v640
        %v651 = vmul.f32 %v627, %v640
        %v652 = vmul.f32 %v628, %v640
        %v653 = vmul.f32 %v629, %v640
        %v654 = vmul.f32 %v630, %v640
        %v655 = vmul.f32 %v631, %v640
        %v656 = vmul.f32 %v632, %v640
        %v657 = vmul.f32 %v633, %v640
        %v658 = vmul.f32 %v634, %v640
        %v659 = vmul.f32 %v635, %v640
        %v660 = vmul.f32 %v636, %v640
        %v661 = vadd.f32 %v597, %v641
        %v662 = vadd.f32 %v598, %v642
        %v663 = vadd.f32 %v599, %v643
        %v664 = vadd.f32 %v600, %v644
        %v665 = vadd.f32 %v601, %v645
        %v666 = vadd.f32 %v602, %v646
        %v667 = vadd.f32 %v603, %v647
        %v668 = vadd.f32 %v604, %v648
        %v669 = vadd.f32 %v605, %v649
        %v670 = vadd.f32 %v606, %v650
        %v671 = vadd.f32 %v607, %v651
        %v672 = vadd.f32 %v608, %v652
        %v673 = vadd.f32 %v609, %v653
        %v674 = vadd.f32 %v610, %v654
        %v675 = vadd.f32 %v611, %v655
        %v676 = vadd.f32 %v612, %v656
        %v677 = vadd.f32 %v613, %v657
        %v678 = vadd.f32 %v614, %v658
        %v679 = vadd.f32 %v615, %v659
        %v680 = vadd.f32 %v616, %v660
        %s681 = scalar_lea.vmem [#allocation2], 64
        %v682 = vld [vmem:[%s681 + $0x7] sm:$0xff]
        %v683 = vld [vmem:[%s681 + $0xf] sm:$0xff]
        %v684 = vld [vmem:[%s681 + $0x27] sm:$0xff]
        %v685 = vld [vmem:[%s681 + $0x2f] sm:$0xff]
        %v686 = vld [vmem:[%s681 + $0x47] sm:$0xff]
        %v687 = vld [vmem:[%s681 + $0x4f] sm:$0xff]
        %v688 = vld [vmem:[%s681 + $0x67] sm:$0xff]
        %v689 = vld [vmem:[%s681 + $0x6f] sm:$0xff]
        %v690 = vld [vmem:[%s681 + $0x87] sm:$0xff]
        %v691 = vld [vmem:[%s681 + $0x8f] sm:$0xff]
        %v692 = vld [vmem:[%s681 + $0xa7] sm:$0xff]
        %v693 = vld [vmem:[%s681 + $0xaf] sm:$0xff]
        %v694 = vld [vmem:[%s681 + $0xc7] sm:$0xff]
        %v695 = vld [vmem:[%s681 + $0xcf] sm:$0xff]
        %v696 = vld [vmem:[%s681 + $0xe7] sm:$0xff]
        %v697 = vld [vmem:[%s681 + $0xef] sm:$0xff]
        %v698 = vld [vmem:[%s681 + $0x107] sm:$0xff]
        %v699 = vld [vmem:[%s681 + $0x10f] sm:$0xff]
        %v700 = vld [vmem:[%s681 + $0x127] sm:$0xff]
        %v701 = vld [vmem:[%s681 + $0x12f] sm:$0xff]
        %v702 = vlaneseq
        %v703 = vshrl.u32 %v702, 7
        %v704 = vsub.s32 0, %v703
        %v705 = vrot.slane %v295, %v704
        %v706 = vmul.f32 %v682, %v705
        %v707 = vmul.f32 %v683, %v705
        %v708 = vmul.f32 %v684, %v705
        %v709 = vmul.f32 %v685, %v705
        %v710 = vmul.f32 %v686, %v705
        %v711 = vmul.f32 %v687, %v705
        %v712 = vmul.f32 %v688, %v705
        %v713 = vmul.f32 %v689, %v705
        %v714 = vmul.f32 %v690, %v705
        %v715 = vmul.f32 %v691, %v705
        %v716 = vmul.f32 %v692, %v705
        %v717 = vmul.f32 %v693, %v705
        %v718 = vmul.f32 %v694, %v705
        %v719 = vmul.f32 %v695, %v705
        %v720 = vmul.f32 %v696, %v705
        %v721 = vmul.f32 %v697, %v705
        %v722 = vmul.f32 %v698, %v705
        %v723 = vmul.f32 %v699, %v705
        %v724 = vmul.f32 %v700, %v705
        %v725 = vmul.f32 %v701, %v705
        %v726 = vadd.f32 %v661, %v706
        %v727 = vadd.f32 %v662, %v707
        %v728 = vadd.f32 %v663, %v708
        %v729 = vadd.f32 %v664, %v709
        %v730 = vadd.f32 %v665, %v710
        %v731 = vadd.f32 %v666, %v711
        %v732 = vadd.f32 %v667, %v712
        %v733 = vadd.f32 %v668, %v713
        %v734 = vadd.f32 %v669, %v714
        %v735 = vadd.f32 %v670, %v715
        %v736 = vadd.f32 %v671, %v716
        %v737 = vadd.f32 %v672, %v717
        %v738 = vadd.f32 %v673, %v718
        %v739 = vadd.f32 %v674, %v719
        %v740 = vadd.f32 %v675, %v720
        %v741 = vadd.f32 %v676, %v721
        %v742 = vadd.f32 %v677, %v722
        %v743 = vadd.f32 %v678, %v723
        %v744 = vadd.f32 %v679, %v724
        %v745 = vadd.f32 %v680, %v725
        %v746 = vld [vmem:[%s681 + $0x8] sm:$0xff]
        %v747 = vld [vmem:[%s681 + $0x10] sm:$0xff]
        %v748 = vld [vmem:[%s681 + $0x28] sm:$0xff]
        %v749 = vld [vmem:[%s681 + $0x30] sm:$0xff]
        %v750 = vld [vmem:[%s681 + $0x48] sm:$0xff]
        %v751 = vld [vmem:[%s681 + $0x50] sm:$0xff]
        %v752 = vld [vmem:[%s681 + $0x68] sm:$0xff]
        %v753 = vld [vmem:[%s681 + $0x70] sm:$0xff]
        %v754 = vld [vmem:[%s681 + $0x88] sm:$0xff]
        %v755 = vld [vmem:[%s681 + $0x90] sm:$0xff]
        %v756 = vld [vmem:[%s681 + $0xa8] sm:$0xff]
        %v757 = vld [vmem:[%s681 + $0xb0] sm:$0xff]
        %v758 = vld [vmem:[%s681 + $0xc8] sm:$0xff]
        %v759 = vld [vmem:[%s681 + $0xd0] sm:$0xff]
        %v760 = vld [vmem:[%s681 + $0xe8] sm:$0xff]
        %v761 = vld [vmem:[%s681 + $0xf0] sm:$0xff]
        %v762 = vld [vmem:[%s681 + $0x108] sm:$0xff]
        %v763 = vld [vmem:[%s681 + $0x110] sm:$0xff]
        %v764 = vld [vmem:[%s681 + $0x128] sm:$0xff]
        %v765 = vld [vmem:[%s681 + $0x130] sm:$0xff]
        %v766 = vlaneseq
        %v767 = vshrl.u32 %v766, 7
        %v768 = vsub.s32 1, %v767
        %v769 = vrot.slane %v295, %v768
        %v770 = vmul.f32 %v746, %v769
        %v771 = vmul.f32 %v747, %v769
        %v772 = vmul.f32 %v748, %v769
        %v773 = vmul.f32 %v749, %v769
        %v774 = vmul.f32 %v750, %v769
        %v775 = vmul.f32 %v751, %v769
        %v776 = vmul.f32 %v752, %v769
        %v777 = vmul.f32 %v753, %v769
        %v778 = vmul.f32 %v754, %v769
        %v779 = vmul.f32 %v755, %v769
        %v780 = vmul.f32 %v756, %v769
        %v781 = vmul.f32 %v757, %v769
        %v782 = vmul.f32 %v758, %v769
        %v783 = vmul.f32 %v759, %v769
        %v784 = vmul.f32 %v760, %v769
        %v785 = vmul.f32 %v761, %v769
        %v786 = vmul.f32 %v762, %v769
        %v787 = vmul.f32 %v763, %v769
        %v788 = vmul.f32 %v764, %v769
        %v789 = vmul.f32 %v765, %v769
        %v790 = vadd.f32 %v726, %v770
        %v791 = vadd.f32 %v727, %v771
        %v792 = vadd.f32 %v728, %v772
        %v793 = vadd.f32 %v729, %v773
        %v794 = vadd.f32 %v730, %v774
        %v795 = vadd.f32 %v731, %v775
        %v796 = vadd.f32 %v732, %v776
        %v797 = vadd.f32 %v733, %v777
        %v798 = vadd.f32 %v734, %v778
        %v799 = vadd.f32 %v735, %v779
        %v800 = vadd.f32 %v736, %v780
        %v801 = vadd.f32 %v737, %v781
        %v802 = vadd.f32 %v738, %v782
        %v803 = vadd.f32 %v739, %v783
        %v804 = vadd.f32 %v740, %v784
        %v805 = vadd.f32 %v741, %v785
        %v806 = vadd.f32 %v742, %v786
        %v807 = vadd.f32 %v743, %v787
        %v808 = vadd.f32 %v744, %v788
        %v809 = vadd.f32 %v745, %v789
        %v810 = vld [vmem:[%s681 + $0x9] sm:$0xff]
        %v811 = vld [vmem:[%s681 + $0x11] sm:$0xff]
        %v812 = vld [vmem:[%s681 + $0x29] sm:$0xff]
        %v813 = vld [vmem:[%s681 + $0x31] sm:$0xff]
        %v814 = vld [vmem:[%s681 + $0x49] sm:$0xff]
        %v815 = vld [vmem:[%s681 + $0x51] sm:$0xff]
        %v816 = vld [vmem:[%s681 + $0x69] sm:$0xff]
        %v817 = vld [vmem:[%s681 + $0x71] sm:$0xff]
        %v818 = vld [vmem:[%s681 + $0x89] sm:$0xff]
        %v819 = vld [vmem:[%s681 + $0x91] sm:$0xff]
        %v820 = vld [vmem:[%s681 + $0xa9] sm:$0xff]
        %v821 = vld [vmem:[%s681 + $0xb1] sm:$0xff]
        %v822 = vld [vmem:[%s681 + $0xc9] sm:$0xff]
        %v823 = vld [vmem:[%s681 + $0xd1] sm:$0xff]
        %v824 = vld [vmem:[%s681 + $0xe9] sm:$0xff]
        %v825 = vld [vmem:[%s681 + $0xf1] sm:$0xff]
        %v826 = vld [vmem:[%s681 + $0x109] sm:$0xff]
        %v827 = vld [vmem:[%s681 + $0x111] sm:$0xff]
        %v828 = vld [vmem:[%s681 + $0x129] sm:$0xff]
        %v829 = vld [vmem:[%s681 + $0x131] sm:$0xff]
        %v830 = vlaneseq
        %v831 = vshrl.u32 %v830, 7
        %v832 = vsub.s32 2, %v831
        %v833 = vrot.slane %v295, %v832
        %v834 = vmul.f32 %v810, %v833
        %v835 = vmul.f32 %v811, %v833
        %v836 = vmul.f32 %v812, %v833
        %v837 = vmul.f32 %v813, %v833
        %v838 = vmul.f32 %v814, %v833
        %v839 = vmul.f32 %v815, %v833
        %v840 = vmul.f32 %v816, %v833
        %v841 = vmul.f32 %v817, %v833
        %v842 = vmul.f32 %v818, %v833
        %v843 = vmul.f32 %v819, %v833
        %v844 = vmul.f32 %v820, %v833
        %v845 = vmul.f32 %v821, %v833
        %v846 = vmul.f32 %v822, %v833
        %v847 = vmul.f32 %v823, %v833
        %v848 = vmul.f32 %v824, %v833
        %v849 = vmul.f32 %v825, %v833
        %v850 = vmul.f32 %v826, %v833
        %v851 = vmul.f32 %v827, %v833
        %v852 = vmul.f32 %v828, %v833
        %v853 = vmul.f32 %v829, %v833
        %v854 = vadd.f32 %v790, %v834
        %v855 = vadd.f32 %v791, %v835
        %v856 = vadd.f32 %v792, %v836
        %v857 = vadd.f32 %v793, %v837
        %v858 = vadd.f32 %v794, %v838
        %v859 = vadd.f32 %v795, %v839
        %v860 = vadd.f32 %v796, %v840
        %v861 = vadd.f32 %v797, %v841
        %v862 = vadd.f32 %v798, %v842
        %v863 = vadd.f32 %v799, %v843
        %v864 = vadd.f32 %v800, %v844
        %v865 = vadd.f32 %v801, %v845
        %v866 = vadd.f32 %v802, %v846
        %v867 = vadd.f32 %v803, %v847
        %v868 = vadd.f32 %v804, %v848
        %v869 = vadd.f32 %v805, %v849
        %v870 = vadd.f32 %v806, %v850
        %v871 = vadd.f32 %v807, %v851
        %v872 = vadd.f32 %v808, %v852
        %v873 = vadd.f32 %v809, %v853
        %v874 = vld [vmem:[#allocation4] sm:$0xff]
        %v875 = vld [vmem:[#allocation4 + $0x8] sm:$0xff]
        %v876 = vld [vmem:[#allocation4 + $0x10] sm:$0xff]
        %v877 = vld [vmem:[#allocation4 + $0x18] sm:$0xff]
        %v878 = vld [vmem:[#allocation4 + $0x20] sm:$0xff]
        %v879 = vld [vmem:[#allocation4 + $0x28] sm:$0xff]
        %v880 = vld [vmem:[#allocation4 + $0x30] sm:$0xff]
        %v881 = vld [vmem:[#allocation4 + $0x38] sm:$0xff]
        %v882 = vld [vmem:[#allocation4 + $0x40] sm:$0xff]
        %v883 = vld [vmem:[#allocation4 + $0x48] sm:$0xff]
        %v884 = vld [vmem:[#allocation4 + $0x50] sm:$0xff]
        %v885 = vld [vmem:[#allocation4 + $0x58] sm:$0xff]
        %v886 = vld [vmem:[#allocation4 + $0x60] sm:$0xff]
        %v887 = vld [vmem:[#allocation4 + $0x68] sm:$0xff]
        %v888 = vld [vmem:[#allocation4 + $0x70] sm:$0xff]
        %v889 = vld [vmem:[#allocation4 + $0x78] sm:$0xff]
        %v890 = vld [vmem:[%s3] sm:$0x1]
        %v892 = vlaneseq
        %v893 = vshrl.u32 %v892, 7
        %v894 = vsub.s32 0, %v893
        %v895 = vrot.slane %v890, %v894
        %897 = vmatprep.subr.mxu0 0.0
        %898 = vmatpush1.msra.mxu0 %v889
        %899 = vmatprep.subr.mxu0 0.0
        %900 = vmatpush1.msra.mxu0 %v888
        %901 = vmatprep.subr.mxu0 0.0
        %902 = vmatpush1.msra.mxu0 %v887
        %903 = vmatprep.subr.mxu0 0.0
        %904 = vmatpush1.msra.mxu0 %v886
        %905 = vmatprep.subr.mxu0 0.0
        %906 = vmatpush1.msra.mxu0 %v885
        %907 = vmatprep.subr.mxu0 0.0
        %908 = vmatpush1.msra.mxu0 %v884
        %909 = vmatprep.subr.mxu0 0.0
        %910 = vmatpush1.msra.mxu0 %v883
        %911 = vmatprep.subr.mxu0 0.0
        %912 = vmatpush1.msra.mxu0 %v882
        %913 = vmatprep.subr.mxu0 0.0
        %914 = vmatpush1.msra.mxu0 %v881
        %915 = vmatprep.subr.mxu0 0.0
        %916 = vmatpush1.msra.mxu0 %v880
        %917 = vmatprep.subr.mxu0 0.0
        %918 = vmatpush1.msra.mxu0 %v879
        %919 = vmatprep.subr.mxu0 0.0
        %920 = vmatpush1.msra.mxu0 %v878
        %921 = vmatprep.subr.mxu0 0.0
        %922 = vmatpush1.msra.mxu0 %v877
        %923 = vmatprep.subr.mxu0 0.0
        %924 = vmatpush1.msra.mxu0 %v876
        %925 = vmatprep.subr.mxu0 0.0
        %926 = vmatpush1.msra.mxu0 %v875
        %927 = vmatprep.subr.mxu0 0.0
        %928 = vmatpush1.msra.mxu0 %v874
        %929 = vmatprep.subr.mxu0 0.0
        %930 = vmatpush2.msra.mxu0 0.0
        %931 = vmatprep.subr.mxu0 0.0
        %932 = vmatpush2.msra.mxu0 0.0
        %933 = vmatprep.subr.mxu0 0.0
        %934 = vmatpush2.msra.mxu0 0.0
        %935 = vmatprep.subr.mxu0 0.0
        %936 = vmatpush2.msra.mxu0 0.0
        %937 = vmatprep.subr.mxu0 0.0
        %938 = vmatpush2.msra.mxu0 0.0
        %939 = vmatprep.subr.mxu0 0.0
        %940 = vmatpush2.msra.mxu0 0.0
        %941 = vmatprep.subr.mxu0 0.0
        %942 = vmatpush2.msra.mxu0 0.0
        %943 = vmatprep.subr.mxu0 0.0
        %944 = vmatpush2.msra.mxu0 0.0
        %945 = vmatprep.subr.mxu0 0.0
        %946 = vmatpush2.msra.mxu0 0.0
        %947 = vmatprep.subr.mxu0 0.0
        %948 = vmatpush2.msra.mxu0 0.0
        %949 = vmatprep.subr.mxu0 0.0
        %950 = vmatpush2.msra.mxu0 0.0
        %951 = vmatprep.subr.mxu0 0.0
        %952 = vmatpush2.msra.mxu0 0.0
        %953 = vmatprep.subr.mxu0 0.0
        %954 = vmatpush2.msra.mxu0 0.0
        %955 = vmatprep.subr.mxu0 0.0
        %956 = vmatpush2.msra.mxu0 0.0
        %957 = vmatprep.subr.mxu0 0.0
        %958 = vmatpush2.msra.mxu0 0.0
        %959 = vmatprep.subr.mxu0 0.0
        %960 = vmatpush2.msra.mxu0 0.0
        %961 = vmatprep.mubr.f32.mxu0 0.0
        %962 = vmatmul.mubr.f32.gmra.mxu0 %v854
        %v963 = vpop.f32.mrf.mxu0
        %v964 = vadd.f32 %v895, %v963
        %v965 = vpop.f32.mrf.mxu0
        %966 = vmatprep.mubr.f32.mxu0 0.0
        %967 = vmatmul.mubr.f32.gmra.mxu0 %v855
        %v968 = vpop.f32.mrf.mxu0
        %v969 = vadd.f32 %v895, %v968
        %v970 = vpop.f32.mrf.mxu0
        %971 = vmatprep.mubr.f32.mxu0 0.0
        %972 = vmatmul.mubr.f32.gmra.mxu0 %v856
        %v973 = vpop.f32.mrf.mxu0
        %v974 = vadd.f32 %v895, %v973
        %v975 = vpop.f32.mrf.mxu0
        %976 = vmatprep.mubr.f32.mxu0 0.0
        %977 = vmatmul.mubr.f32.gmra.mxu0 %v857
        %v978 = vpop.f32.mrf.mxu0
        %v979 = vadd.f32 %v895, %v978
        %v980 = vpop.f32.mrf.mxu0
        %981 = vmatprep.mubr.f32.mxu0 0.0
        %982 = vmatmul.mubr.f32.gmra.mxu0 %v858
        %v983 = vpop.f32.mrf.mxu0
        %v984 = vadd.f32 %v895, %v983
        %v985 = vpop.f32.mrf.mxu0
        %986 = vmatprep.mubr.f32.mxu0 0.0
        %987 = vmatmul.mubr.f32.gmra.mxu0 %v859
        %v988 = vpop.f32.mrf.mxu0
        %v989 = vadd.f32 %v895, %v988
        %v990 = vpop.f32.mrf.mxu0
        %991 = vmatprep.mubr.f32.mxu0 0.0
        %992 = vmatmul.mubr.f32.gmra.mxu0 %v860
        %v993 = vpop.f32.mrf.mxu0
        %v994 = vadd.f32 %v895, %v993
        %v995 = vpop.f32.mrf.mxu0
        %996 = vmatprep.mubr.f32.mxu0 0.0
        %997 = vmatmul.mubr.f32.gmra.mxu0 %v861
        %v998 = vpop.f32.mrf.mxu0
        %v999 = vadd.f32 %v895, %v998
        %v1000 = vpop.f32.mrf.mxu0
        %1001 = vmatprep.mubr.f32.mxu0 0.0
        %1002 = vmatmul.mubr.f32.gmra.mxu0 %v862
        %v1003 = vpop.f32.mrf.mxu0
        %v1004 = vadd.f32 %v895, %v1003
        %v1005 = vpop.f32.mrf.mxu0
        %1006 = vmatprep.mubr.f32.mxu0 0.0
        %1007 = vmatmul.mubr.f32.gmra.mxu0 %v863
        %v1008 = vpop.f32.mrf.mxu0
        %v1009 = vadd.f32 %v895, %v1008
        %v1010 = vpop.f32.mrf.mxu0
        %1011 = vmatprep.mubr.f32.mxu0 0.0
        %1012 = vmatmul.mubr.f32.gmra.mxu0 %v864
        %v1013 = vpop.f32.mrf.mxu0
        %v1014 = vadd.f32 %v895, %v1013
        %v1015 = vpop.f32.mrf.mxu0
        %1016 = vmatprep.mubr.f32.mxu0 0.0
        %1017 = vmatmul.mubr.f32.gmra.mxu0 %v865
        %v1018 = vpop.f32.mrf.mxu0
        %v1019 = vadd.f32 %v895, %v1018
        %v1020 = vpop.f32.mrf.mxu0
        %1021 = vmatprep.mubr.f32.mxu0 0.0
        %1022 = vmatmul.mubr.f32.gmra.mxu0 %v866
        %v1023 = vpop.f32.mrf.mxu0
        %v1024 = vadd.f32 %v895, %v1023
        %v1025 = vpop.f32.mrf.mxu0
        %1026 = vmatprep.mubr.f32.mxu0 0.0
        %1027 = vmatmul.mubr.f32.gmra.mxu0 %v867
        %v1028 = vpop.f32.mrf.mxu0
        %v1029 = vadd.f32 %v895, %v1028
        %v1030 = vpop.f32.mrf.mxu0
        %1031 = vmatprep.mubr.f32.mxu0 0.0
        %1032 = vmatmul.mubr.f32.gmra.mxu0 %v868
        %v1033 = vpop.f32.mrf.mxu0
        %v1034 = vadd.f32 %v895, %v1033
        %v1035 = vpop.f32.mrf.mxu0
        %1036 = vmatprep.mubr.f32.mxu0 0.0
        %1037 = vmatmul.mubr.f32.gmra.mxu0 %v869
        %v1038 = vpop.f32.mrf.mxu0
        %v1039 = vadd.f32 %v895, %v1038
        %v1040 = vpop.f32.mrf.mxu0
        %1041 = vmatprep.mubr.f32.mxu0 0.0
        %1042 = vmatmul.mubr.f32.gmra.mxu0 %v870
        %v1043 = vpop.f32.mrf.mxu0
        %v1044 = vadd.f32 %v895, %v1043
        %v1045 = vpop.f32.mrf.mxu0
        %1046 = vmatprep.mubr.f32.mxu0 0.0
        %1047 = vmatmul.mubr.f32.gmra.mxu0 %v871
        %v1048 = vpop.f32.mrf.mxu0
        %v1049 = vadd.f32 %v895, %v1048
        %v1050 = vpop.f32.mrf.mxu0
        %1051 = vmatprep.mubr.f32.mxu0 0.0
        %1052 = vmatmul.mubr.f32.gmra.mxu0 %v872
        %v1053 = vpop.f32.mrf.mxu0
        %v1054 = vadd.f32 %v895, %v1053
        %v1055 = vpop.f32.mrf.mxu0
        %1056 = vmatprep.mubr.f32.mxu0 0.0
        %1057 = vmatmul.mubr.f32.gmra.mxu0 %v873
        %v1058 = vpop.f32.mrf.mxu0
        %v1059 = vadd.f32 %v895, %v1058
        %v1060 = vpop.f32.mrf.mxu0
        %1061 = vdwg.mxu0
        %v1062 = vmax.f32 %v964, 0.0
        %v1063 = vmax.f32 %v969, 0.0
        %v1064 = vmax.f32 %v974, 0.0
        %v1065 = vmax.f32 %v979, 0.0
        %v1066 = vmax.f32 %v984, 0.0
        %v1067 = vmax.f32 %v989, 0.0
        %v1068 = vmax.f32 %v994, 0.0
        %v1069 = vmax.f32 %v999, 0.0
        %v1070 = vmax.f32 %v1004, 0.0
        %v1071 = vmax.f32 %v1009, 0.0
        %v1072 = vmax.f32 %v1014, 0.0
        %v1073 = vmax.f32 %v1019, 0.0
        %v1074 = vmax.f32 %v1024, 0.0
        %v1075 = vmax.f32 %v1029, 0.0
        %v1076 = vmax.f32 %v1034, 0.0
        %v1077 = vmax.f32 %v1039, 0.0
        %v1078 = vmax.f32 %v1044, 0.0
        %v1079 = vmax.f32 %v1049, 0.0
        %v1080 = vmax.f32 %v1054, 0.0
        %v1081 = vmax.f32 %v1059, 0.0
        %1082 = vst [vmem:[%s488 + $0x8] sm:$0xff] %v1062
        %1083 = vst [vmem:[%s488 + $0x10] sm:$0xff] %v1063
        %1084 = vst [vmem:[%s488 + $0x28] sm:$0xff] %v1064
        %1085 = vst [vmem:[%s488 + $0x30] sm:$0xff] %v1065
        %1086 = vst [vmem:[%s488 + $0x48] sm:$0xff] %v1066
        %1087 = vst [vmem:[%s488 + $0x50] sm:$0xff] %v1067
        %1088 = vst [vmem:[%s488 + $0x68] sm:$0xff] %v1068
        %1089 = vst [vmem:[%s488 + $0x70] sm:$0xff] %v1069
        %1090 = vst [vmem:[%s488 + $0x88] sm:$0xff] %v1070
        %1091 = vst [vmem:[%s488 + $0x90] sm:$0xff] %v1071
        %1092 = vst [vmem:[%s488 + $0xa8] sm:$0xff] %v1072
        %1093 = vst [vmem:[%s488 + $0xb0] sm:$0xff] %v1073
        %1094 = vst [vmem:[%s488 + $0xc8] sm:$0xff] %v1074
        %1095 = vst [vmem:[%s488 + $0xd0] sm:$0xff] %v1075
        %1096 = vst [vmem:[%s488 + $0xe8] sm:$0xff] %v1076
        %1097 = vst [vmem:[%s488 + $0xf0] sm:$0xff] %v1077
        %1098 = vst [vmem:[%s488 + $0x108] sm:$0xff] %v1078
        %1099 = vst [vmem:[%s488 + $0x110] sm:$0xff] %v1079
        %1100 = vst [vmem:[%s488 + $0x128] sm:$0xff] %v1080
        %1101 = vst [vmem:[%s488 + $0x130] sm:$0xff] %v1081
        %p1102 = scmp.eq.s32.totalorder %s28, 0
        // Predicated region
        $region45: #{tpu_custom_call.1} parent=35 // pred_check
          %p1103 = pneg %p1102
        $region46: #{tpu_custom_call.1} parent=35 // pred_check_branch
          %1105 = sbr.rel (%p1103) target = $region48
        $region47: #{tpu_custom_call.1} parent=35 // pred_region
          %1106 = vst [vmem:[%s488 + $0x8] sm:$0xff] 0.0
          %1107 = vst [vmem:[%s488 + $0x10] sm:$0xff] 0.0
        $region48: #{tpu_custom_call.1} parent=35 // pred_fallthru
          _
        %p1108 = scmp.eq.s32.totalorder %s28, 1
        // Predicated region
        $region49: #{tpu_custom_call.1} parent=35 // pred_check
          %p1109 = pneg %p1108
        $region50: #{tpu_custom_call.1} parent=35 // pred_check_branch
          %1111 = sbr.rel (%p1109) target = $region52
        $region51: #{tpu_custom_call.1} parent=35 // pred_region
          %s1112 = scalar_lea.vmem [#allocation2], 320
          %1113 = vst [vmem:[%s1112 + $0x8] sm:$0xff] 0.0
          %1114 = vst [vmem:[%s1112 + $0x10] sm:$0xff] 0.0
        $region52: #{tpu_custom_call.1} parent=35 // pred_fallthru
          _
        %s1115 = scalar_lea.vmem %s1, 12
        %v1116 = vld [vmem:[%s1115] sm:$0x7]
        %v1117 = vld [vmem:[%s1115 + $0x4] sm:$0x7]
        %v1118 = vld [vmem:[%s1115 + $0x8] sm:$0x7]
        %v1119 = vld [vmem:[%s488 + $0x7] sm:$0xff]
        %v1120 = vld [vmem:[%s488 + $0xf] sm:$0xff]
        %v1121 = vld [vmem:[%s488 + $0x27] sm:$0xff]
        %v1122 = vld [vmem:[%s488 + $0x2f] sm:$0xff]
        %v1123 = vld [vmem:[%s488 + $0x47] sm:$0xff]
        %v1124 = vld [vmem:[%s488 + $0x4f] sm:$0xff]
        %v1125 = vld [vmem:[%s488 + $0x67] sm:$0xff]
        %v1126 = vld [vmem:[%s488 + $0x6f] sm:$0xff]
        %v1127 = vld [vmem:[%s488 + $0x87] sm:$0xff]
        %v1128 = vld [vmem:[%s488 + $0x8f] sm:$0xff]
        %v1129 = vld [vmem:[%s488 + $0xa7] sm:$0xff]
        %v1130 = vld [vmem:[%s488 + $0xaf] sm:$0xff]
        %v1131 = vld [vmem:[%s488 + $0xc7] sm:$0xff]
        %v1132 = vld [vmem:[%s488 + $0xcf] sm:$0xff]
        %v1133 = vld [vmem:[%s488 + $0xe7] sm:$0xff]
        %v1134 = vld [vmem:[%s488 + $0xef] sm:$0xff]
        %v1135 = vlaneseq
        %v1136 = vshrl.u32 %v1135, 7
        %v1137 = vsub.s32 0, %v1136
        %v1138 = vrot.slane %v1116, %v1137
        %v1139 = vmul.f32 %v1119, %v1138
        %v1140 = vmul.f32 %v1120, %v1138
        %v1141 = vmul.f32 %v1121, %v1138
        %v1142 = vmul.f32 %v1122, %v1138
        %v1143 = vmul.f32 %v1123, %v1138
        %v1144 = vmul.f32 %v1124, %v1138
        %v1145 = vmul.f32 %v1125, %v1138
        %v1146 = vmul.f32 %v1126, %v1138
        %v1147 = vmul.f32 %v1127, %v1138
        %v1148 = vmul.f32 %v1128, %v1138
        %v1149 = vmul.f32 %v1129, %v1138
        %v1150 = vmul.f32 %v1130, %v1138
        %v1151 = vmul.f32 %v1131, %v1138
        %v1152 = vmul.f32 %v1132, %v1138
        %v1153 = vmul.f32 %v1133, %v1138
        %v1154 = vmul.f32 %v1134, %v1138
        %v1155 = vadd.f32 %v1139, 0.0
        %v1156 = vadd.f32 %v1140, 0.0
        %v1157 = vadd.f32 %v1141, 0.0
        %v1158 = vadd.f32 %v1142, 0.0
        %v1159 = vadd.f32 %v1143, 0.0
        %v1160 = vadd.f32 %v1144, 0.0
        %v1161 = vadd.f32 %v1145, 0.0
        %v1162 = vadd.f32 %v1146, 0.0
        %v1163 = vadd.f32 %v1147, 0.0
        %v1164 = vadd.f32 %v1148, 0.0
        %v1165 = vadd.f32 %v1149, 0.0
        %v1166 = vadd.f32 %v1150, 0.0
        %v1167 = vadd.f32 %v1151, 0.0
        %v1168 = vadd.f32 %v1152, 0.0
        %v1169 = vadd.f32 %v1153, 0.0
        %v1170 = vadd.f32 %v1154, 0.0
        %v1171 = vld [vmem:[%s488 + $0x8] sm:$0xff]
        %v1172 = vld [vmem:[%s488 + $0x10] sm:$0xff]
        %v1173 = vld [vmem:[%s488 + $0x28] sm:$0xff]
        %v1174 = vld [vmem:[%s488 + $0x30] sm:$0xff]
        %v1175 = vld [vmem:[%s488 + $0x48] sm:$0xff]
        %v1176 = vld [vmem:[%s488 + $0x50] sm:$0xff]
        %v1177 = vld [vmem:[%s488 + $0x68] sm:$0xff]
        %v1178 = vld [vmem:[%s488 + $0x70] sm:$0xff]
        %v1179 = vld [vmem:[%s488 + $0x88] sm:$0xff]
        %v1180 = vld [vmem:[%s488 + $0x90] sm:$0xff]
        %v1181 = vld [vmem:[%s488 + $0xa8] sm:$0xff]
        %v1182 = vld [vmem:[%s488 + $0xb0] sm:$0xff]
        %v1183 = vld [vmem:[%s488 + $0xc8] sm:$0xff]
        %v1184 = vld [vmem:[%s488 + $0xd0] sm:$0xff]
        %v1185 = vld [vmem:[%s488 + $0xe8] sm:$0xff]
        %v1186 = vld [vmem:[%s488 + $0xf0] sm:$0xff]
        %v1187 = vlaneseq
        %v1188 = vshrl.u32 %v1187, 7
        %v1189 = vsub.s32 1, %v1188
        %v1190 = vrot.slane %v1116, %v1189
        %v1191 = vmul.f32 %v1171, %v1190
        %v1192 = vmul.f32 %v1172, %v1190
        %v1193 = vmul.f32 %v1173, %v1190
        %v1194 = vmul.f32 %v1174, %v1190
        %v1195 = vmul.f32 %v1175, %v1190
        %v1196 = vmul.f32 %v1176, %v1190
        %v1197 = vmul.f32 %v1177, %v1190
        %v1198 = vmul.f32 %v1178, %v1190
        %v1199 = vmul.f32 %v1179, %v1190
        %v1200 = vmul.f32 %v1180, %v1190
        %v1201 = vmul.f32 %v1181, %v1190
        %v1202 = vmul.f32 %v1182, %v1190
        %v1203 = vmul.f32 %v1183, %v1190
        %v1204 = vmul.f32 %v1184, %v1190
        %v1205 = vmul.f32 %v1185, %v1190
        %v1206 = vmul.f32 %v1186, %v1190
        %v1207 = vadd.f32 %v1155, %v1191
        %v1208 = vadd.f32 %v1156, %v1192
        %v1209 = vadd.f32 %v1157, %v1193
        %v1210 = vadd.f32 %v1158, %v1194
        %v1211 = vadd.f32 %v1159, %v1195
        %v1212 = vadd.f32 %v1160, %v1196
        %v1213 = vadd.f32 %v1161, %v1197
        %v1214 = vadd.f32 %v1162, %v1198
        %v1215 = vadd.f32 %v1163, %v1199
        %v1216 = vadd.f32 %v1164, %v1200
        %v1217 = vadd.f32 %v1165, %v1201
        %v1218 = vadd.f32 %v1166, %v1202
        %v1219 = vadd.f32 %v1167, %v1203
        %v1220 = vadd.f32 %v1168, %v1204
        %v1221 = vadd.f32 %v1169, %v1205
        %v1222 = vadd.f32 %v1170, %v1206
        %v1223 = vld [vmem:[%s488 + $0x9] sm:$0xff]
        %v1224 = vld [vmem:[%s488 + $0x11] sm:$0xff]
        %v1225 = vld [vmem:[%s488 + $0x29] sm:$0xff]
        %v1226 = vld [vmem:[%s488 + $0x31] sm:$0xff]
        %v1227 = vld [vmem:[%s488 + $0x49] sm:$0xff]
        %v1228 = vld [vmem:[%s488 + $0x51] sm:$0xff]
        %v1229 = vld [vmem:[%s488 + $0x69] sm:$0xff]
        %v1230 = vld [vmem:[%s488 + $0x71] sm:$0xff]
        %v1231 = vld [vmem:[%s488 + $0x89] sm:$0xff]
        %v1232 = vld [vmem:[%s488 + $0x91] sm:$0xff]
        %v1233 = vld [vmem:[%s488 + $0xa9] sm:$0xff]
        %v1234 = vld [vmem:[%s488 + $0xb1] sm:$0xff]
        %v1235 = vld [vmem:[%s488 + $0xc9] sm:$0xff]
        %v1236 = vld [vmem:[%s488 + $0xd1] sm:$0xff]
        %v1237 = vld [vmem:[%s488 + $0xe9] sm:$0xff]
        %v1238 = vld [vmem:[%s488 + $0xf1] sm:$0xff]
        %v1239 = vlaneseq
        %v1240 = vshrl.u32 %v1239, 7
        %v1241 = vsub.s32 2, %v1240
        %v1242 = vrot.slane %v1116, %v1241
        %v1243 = vmul.f32 %v1223, %v1242
        %v1244 = vmul.f32 %v1224, %v1242
        %v1245 = vmul.f32 %v1225, %v1242
        %v1246 = vmul.f32 %v1226, %v1242
        %v1247 = vmul.f32 %v1227, %v1242
        %v1248 = vmul.f32 %v1228, %v1242
        %v1249 = vmul.f32 %v1229, %v1242
        %v1250 = vmul.f32 %v1230, %v1242
        %v1251 = vmul.f32 %v1231, %v1242
        %v1252 = vmul.f32 %v1232, %v1242
        %v1253 = vmul.f32 %v1233, %v1242
        %v1254 = vmul.f32 %v1234, %v1242
        %v1255 = vmul.f32 %v1235, %v1242
        %v1256 = vmul.f32 %v1236, %v1242
        %v1257 = vmul.f32 %v1237, %v1242
        %v1258 = vmul.f32 %v1238, %v1242
        %v1259 = vadd.f32 %v1207, %v1243
        %v1260 = vadd.f32 %v1208, %v1244
        %v1261 = vadd.f32 %v1209, %v1245
        %v1262 = vadd.f32 %v1210, %v1246
        %v1263 = vadd.f32 %v1211, %v1247
        %v1264 = vadd.f32 %v1212, %v1248
        %v1265 = vadd.f32 %v1213, %v1249
        %v1266 = vadd.f32 %v1214, %v1250
        %v1267 = vadd.f32 %v1215, %v1251
        %v1268 = vadd.f32 %v1216, %v1252
        %v1269 = vadd.f32 %v1217, %v1253
        %v1270 = vadd.f32 %v1218, %v1254
        %v1271 = vadd.f32 %v1219, %v1255
        %v1272 = vadd.f32 %v1220, %v1256
        %v1273 = vadd.f32 %v1221, %v1257
        %v1274 = vadd.f32 %v1222, %v1258
        %v1275 = vld [vmem:[%s681 + $0x7] sm:$0xff]
        %v1276 = vld [vmem:[%s681 + $0xf] sm:$0xff]
        %v1277 = vld [vmem:[%s681 + $0x27] sm:$0xff]
        %v1278 = vld [vmem:[%s681 + $0x2f] sm:$0xff]
        %v1279 = vld [vmem:[%s681 + $0x47] sm:$0xff]
        %v1280 = vld [vmem:[%s681 + $0x4f] sm:$0xff]
        %v1281 = vld [vmem:[%s681 + $0x67] sm:$0xff]
        %v1282 = vld [vmem:[%s681 + $0x6f] sm:$0xff]
        %v1283 = vld [vmem:[%s681 + $0x87] sm:$0xff]
        %v1284 = vld [vmem:[%s681 + $0x8f] sm:$0xff]
        %v1285 = vld [vmem:[%s681 + $0xa7] sm:$0xff]
        %v1286 = vld [vmem:[%s681 + $0xaf] sm:$0xff]
        %v1287 = vld [vmem:[%s681 + $0xc7] sm:$0xff]
        %v1288 = vld [vmem:[%s681 + $0xcf] sm:$0xff]
        %v1289 = vld [vmem:[%s681 + $0xe7] sm:$0xff]
        %v1290 = vld [vmem:[%s681 + $0xef] sm:$0xff]
        %v1291 = vlaneseq
        %v1292 = vshrl.u32 %v1291, 7
        %v1293 = vsub.s32 0, %v1292
        %v1294 = vrot.slane %v1117, %v1293
        %v1295 = vmul.f32 %v1275, %v1294
        %v1296 = vmul.f32 %v1276, %v1294
        %v1297 = vmul.f32 %v1277, %v1294
        %v1298 = vmul.f32 %v1278, %v1294
        %v1299 = vmul.f32 %v1279, %v1294
        %v1300 = vmul.f32 %v1280, %v1294
        %v1301 = vmul.f32 %v1281, %v1294
        %v1302 = vmul.f32 %v1282, %v1294
        %v1303 = vmul.f32 %v1283, %v1294
        %v1304 = vmul.f32 %v1284, %v1294
        %v1305 = vmul.f32 %v1285, %v1294
        %v1306 = vmul.f32 %v1286, %v1294
        %v1307 = vmul.f32 %v1287, %v1294
        %v1308 = vmul.f32 %v1288, %v1294
        %v1309 = vmul.f32 %v1289, %v1294
        %v1310 = vmul.f32 %v1290, %v1294
        %v1311 = vadd.f32 %v1259, %v1295
        %v1312 = vadd.f32 %v1260, %v1296
        %v1313 = vadd.f32 %v1261, %v1297
        %v1314 = vadd.f32 %v1262, %v1298
        %v1315 = vadd.f32 %v1263, %v1299
        %v1316 = vadd.f32 %v1264, %v1300
        %v1317 = vadd.f32 %v1265, %v1301
        %v1318 = vadd.f32 %v1266, %v1302
        %v1319 = vadd.f32 %v1267, %v1303
        %v1320 = vadd.f32 %v1268, %v1304
        %v1321 = vadd.f32 %v1269, %v1305
        %v1322 = vadd.f32 %v1270, %v1306
        %v1323 = vadd.f32 %v1271, %v1307
        %v1324 = vadd.f32 %v1272, %v1308
        %v1325 = vadd.f32 %v1273, %v1309
        %v1326 = vadd.f32 %v1274, %v1310
        %v1327 = vld [vmem:[%s681 + $0x8] sm:$0xff]
        %v1328 = vld [vmem:[%s681 + $0x10] sm:$0xff]
        %v1329 = vld [vmem:[%s681 + $0x28] sm:$0xff]
        %v1330 = vld [vmem:[%s681 + $0x30] sm:$0xff]
        %v1331 = vld [vmem:[%s681 + $0x48] sm:$0xff]
        %v1332 = vld [vmem:[%s681 + $0x50] sm:$0xff]
        %v1333 = vld [vmem:[%s681 + $0x68] sm:$0xff]
        %v1334 = vld [vmem:[%s681 + $0x70] sm:$0xff]
        %v1335 = vld [vmem:[%s681 + $0x88] sm:$0xff]
        %v1336 = vld [vmem:[%s681 + $0x90] sm:$0xff]
        %v1337 = vld [vmem:[%s681 + $0xa8] sm:$0xff]
        %v1338 = vld [vmem:[%s681 + $0xb0] sm:$0xff]
        %v1339 = vld [vmem:[%s681 + $0xc8] sm:$0xff]
        %v1340 = vld [vmem:[%s681 + $0xd0] sm:$0xff]
        %v1341 = vld [vmem:[%s681 + $0xe8] sm:$0xff]
        %v1342 = vld [vmem:[%s681 + $0xf0] sm:$0xff]
        %v1343 = vlaneseq
        %v1344 = vshrl.u32 %v1343, 7
        %v1345 = vsub.s32 1, %v1344
        %v1346 = vrot.slane %v1117, %v1345
        %v1347 = vmul.f32 %v1327, %v1346
        %v1348 = vmul.f32 %v1328, %v1346
        %v1349 = vmul.f32 %v1329, %v1346
        %v1350 = vmul.f32 %v1330, %v1346
        %v1351 = vmul.f32 %v1331, %v1346
        %v1352 = vmul.f32 %v1332, %v1346
        %v1353 = vmul.f32 %v1333, %v1346
        %v1354 = vmul.f32 %v1334, %v1346
        %v1355 = vmul.f32 %v1335, %v1346
        %v1356 = vmul.f32 %v1336, %v1346
        %v1357 = vmul.f32 %v1337, %v1346
        %v1358 = vmul.f32 %v1338, %v1346
        %v1359 = vmul.f32 %v1339, %v1346
        %v1360 = vmul.f32 %v1340, %v1346
        %v1361 = vmul.f32 %v1341, %v1346
        %v1362 = vmul.f32 %v1342, %v1346
        %v1363 = vadd.f32 %v1311, %v1347
        %v1364 = vadd.f32 %v1312, %v1348
        %v1365 = vadd.f32 %v1313, %v1349
        %v1366 = vadd.f32 %v1314, %v1350
        %v1367 = vadd.f32 %v1315, %v1351
        %v1368 = vadd.f32 %v1316, %v1352
        %v1369 = vadd.f32 %v1317, %v1353
        %v1370 = vadd.f32 %v1318, %v1354
        %v1371 = vadd.f32 %v1319, %v1355
        %v1372 = vadd.f32 %v1320, %v1356
        %v1373 = vadd.f32 %v1321, %v1357
        %v1374 = vadd.f32 %v1322, %v1358
        %v1375 = vadd.f32 %v1323, %v1359
        %v1376 = vadd.f32 %v1324, %v1360
        %v1377 = vadd.f32 %v1325, %v1361
        %v1378 = vadd.f32 %v1326, %v1362
        %v1379 = vld [vmem:[%s681 + $0x9] sm:$0xff]
        %v1380 = vld [vmem:[%s681 + $0x11] sm:$0xff]
        %v1381 = vld [vmem:[%s681 + $0x29] sm:$0xff]
        %v1382 = vld [vmem:[%s681 + $0x31] sm:$0xff]
        %v1383 = vld [vmem:[%s681 + $0x49] sm:$0xff]
        %v1384 = vld [vmem:[%s681 + $0x51] sm:$0xff]
        %v1385 = vld [vmem:[%s681 + $0x69] sm:$0xff]
        %v1386 = vld [vmem:[%s681 + $0x71] sm:$0xff]
        %v1387 = vld [vmem:[%s681 + $0x89] sm:$0xff]
        %v1388 = vld [vmem:[%s681 + $0x91] sm:$0xff]
        %v1389 = vld [vmem:[%s681 + $0xa9] sm:$0xff]
        %v1390 = vld [vmem:[%s681 + $0xb1] sm:$0xff]
        %v1391 = vld [vmem:[%s681 + $0xc9] sm:$0xff]
        %v1392 = vld [vmem:[%s681 + $0xd1] sm:$0xff]
        %v1393 = vld [vmem:[%s681 + $0xe9] sm:$0xff]
        %v1394 = vld [vmem:[%s681 + $0xf1] sm:$0xff]
        %v1395 = vlaneseq
        %v1396 = vshrl.u32 %v1395, 7
        %v1397 = vsub.s32 2, %v1396
        %v1398 = vrot.slane %v1117, %v1397
        %v1399 = vmul.f32 %v1379, %v1398
        %v1400 = vmul.f32 %v1380, %v1398
        %v1401 = vmul.f32 %v1381, %v1398
        %v1402 = vmul.f32 %v1382, %v1398
        %v1403 = vmul.f32 %v1383, %v1398
        %v1404 = vmul.f32 %v1384, %v1398
        %v1405 = vmul.f32 %v1385, %v1398
        %v1406 = vmul.f32 %v1386, %v1398
        %v1407 = vmul.f32 %v1387, %v1398
        %v1408 = vmul.f32 %v1388, %v1398
        %v1409 = vmul.f32 %v1389, %v1398
        %v1410 = vmul.f32 %v1390, %v1398
        %v1411 = vmul.f32 %v1391, %v1398
        %v1412 = vmul.f32 %v1392, %v1398
        %v1413 = vmul.f32 %v1393, %v1398
        %v1414 = vmul.f32 %v1394, %v1398
        %v1415 = vadd.f32 %v1363, %v1399
        %v1416 = vadd.f32 %v1364, %v1400
        %v1417 = vadd.f32 %v1365, %v1401
        %v1418 = vadd.f32 %v1366, %v1402
        %v1419 = vadd.f32 %v1367, %v1403
        %v1420 = vadd.f32 %v1368, %v1404
        %v1421 = vadd.f32 %v1369, %v1405
        %v1422 = vadd.f32 %v1370, %v1406
        %v1423 = vadd.f32 %v1371, %v1407
        %v1424 = vadd.f32 %v1372, %v1408
        %v1425 = vadd.f32 %v1373, %v1409
        %v1426 = vadd.f32 %v1374, %v1410
        %v1427 = vadd.f32 %v1375, %v1411
        %v1428 = vadd.f32 %v1376, %v1412
        %v1429 = vadd.f32 %v1377, %v1413
        %v1430 = vadd.f32 %v1378, %v1414
        %s1431 = scalar_lea.vmem [#allocation2], 96
        %v1432 = vld [vmem:[%s1431 + $0x7] sm:$0xff]
        %v1433 = vld [vmem:[%s1431 + $0xf] sm:$0xff]
        %v1434 = vld [vmem:[%s1431 + $0x27] sm:$0xff]
        %v1435 = vld [vmem:[%s1431 + $0x2f] sm:$0xff]
        %v1436 = vld [vmem:[%s1431 + $0x47] sm:$0xff]
        %v1437 = vld [vmem:[%s1431 + $0x4f] sm:$0xff]
        %v1438 = vld [vmem:[%s1431 + $0x67] sm:$0xff]
        %v1439 = vld [vmem:[%s1431 + $0x6f] sm:$0xff]
        %v1440 = vld [vmem:[%s1431 + $0x87] sm:$0xff]
        %v1441 = vld [vmem:[%s1431 + $0x8f] sm:$0xff]
        %v1442 = vld [vmem:[%s1431 + $0xa7] sm:$0xff]
        %v1443 = vld [vmem:[%s1431 + $0xaf] sm:$0xff]
        %v1444 = vld [vmem:[%s1431 + $0xc7] sm:$0xff]
        %v1445 = vld [vmem:[%s1431 + $0xcf] sm:$0xff]
        %v1446 = vld [vmem:[%s1431 + $0xe7] sm:$0xff]
        %v1447 = vld [vmem:[%s1431 + $0xef] sm:$0xff]
        %v1448 = vlaneseq
        %v1449 = vshrl.u32 %v1448, 7
        %v1450 = vsub.s32 0, %v1449
        %v1451 = vrot.slane %v1118, %v1450
        %v1452 = vmul.f32 %v1432, %v1451
        %v1453 = vmul.f32 %v1433, %v1451
        %v1454 = vmul.f32 %v1434, %v1451
        %v1455 = vmul.f32 %v1435, %v1451
        %v1456 = vmul.f32 %v1436, %v1451
        %v1457 = vmul.f32 %v1437, %v1451
        %v1458 = vmul.f32 %v1438, %v1451
        %v1459 = vmul.f32 %v1439, %v1451
        %v1460 = vmul.f32 %v1440, %v1451
        %v1461 = vmul.f32 %v1441, %v1451
        %v1462 = vmul.f32 %v1442, %v1451
        %v1463 = vmul.f32 %v1443, %v1451
        %v1464 = vmul.f32 %v1444, %v1451
        %v1465 = vmul.f32 %v1445, %v1451
        %v1466 = vmul.f32 %v1446, %v1451
        %v1467 = vmul.f32 %v1447, %v1451
        %v1468 = vadd.f32 %v1415, %v1452
        %v1469 = vadd.f32 %v1416, %v1453
        %v1470 = vadd.f32 %v1417, %v1454
        %v1471 = vadd.f32 %v1418, %v1455
        %v1472 = vadd.f32 %v1419, %v1456
        %v1473 = vadd.f32 %v1420, %v1457
        %v1474 = vadd.f32 %v1421, %v1458
        %v1475 = vadd.f32 %v1422, %v1459
        %v1476 = vadd.f32 %v1423, %v1460
        %v1477 = vadd.f32 %v1424, %v1461
        %v1478 = vadd.f32 %v1425, %v1462
        %v1479 = vadd.f32 %v1426, %v1463
        %v1480 = vadd.f32 %v1427, %v1464
        %v1481 = vadd.f32 %v1428, %v1465
        %v1482 = vadd.f32 %v1429, %v1466
        %v1483 = vadd.f32 %v1430, %v1467
        %v1484 = vld [vmem:[%s1431 + $0x8] sm:$0xff]
        %v1485 = vld [vmem:[%s1431 + $0x10] sm:$0xff]
        %v1486 = vld [vmem:[%s1431 + $0x28] sm:$0xff]
        %v1487 = vld [vmem:[%s1431 + $0x30] sm:$0xff]
        %v1488 = vld [vmem:[%s1431 + $0x48] sm:$0xff]
        %v1489 = vld [vmem:[%s1431 + $0x50] sm:$0xff]
        %v1490 = vld [vmem:[%s1431 + $0x68] sm:$0xff]
        %v1491 = vld [vmem:[%s1431 + $0x70] sm:$0xff]
        %v1492 = vld [vmem:[%s1431 + $0x88] sm:$0xff]
        %v1493 = vld [vmem:[%s1431 + $0x90] sm:$0xff]
        %v1494 = vld [vmem:[%s1431 + $0xa8] sm:$0xff]
        %v1495 = vld [vmem:[%s1431 + $0xb0] sm:$0xff]
        %v1496 = vld [vmem:[%s1431 + $0xc8] sm:$0xff]
        %v1497 = vld [vmem:[%s1431 + $0xd0] sm:$0xff]
        %v1498 = vld [vmem:[%s1431 + $0xe8] sm:$0xff]
        %v1499 = vld [vmem:[%s1431 + $0xf0] sm:$0xff]
        %v1500 = vlaneseq
        %v1501 = vshrl.u32 %v1500, 7
        %v1502 = vsub.s32 1, %v1501
        %v1503 = vrot.slane %v1118, %v1502
        %v1504 = vmul.f32 %v1484, %v1503
        %v1505 = vmul.f32 %v1485, %v1503
        %v1506 = vmul.f32 %v1486, %v1503
        %v1507 = vmul.f32 %v1487, %v1503
        %v1508 = vmul.f32 %v1488, %v1503
        %v1509 = vmul.f32 %v1489, %v1503
        %v1510 = vmul.f32 %v1490, %v1503
        %v1511 = vmul.f32 %v1491, %v1503
        %v1512 = vmul.f32 %v1492, %v1503
        %v1513 = vmul.f32 %v1493, %v1503
        %v1514 = vmul.f32 %v1494, %v1503
        %v1515 = vmul.f32 %v1495, %v1503
        %v1516 = vmul.f32 %v1496, %v1503
        %v1517 = vmul.f32 %v1497, %v1503
        %v1518 = vmul.f32 %v1498, %v1503
        %v1519 = vmul.f32 %v1499, %v1503
        %v1520 = vadd.f32 %v1468, %v1504
        %v1521 = vadd.f32 %v1469, %v1505
        %v1522 = vadd.f32 %v1470, %v1506
        %v1523 = vadd.f32 %v1471, %v1507
        %v1524 = vadd.f32 %v1472, %v1508
        %v1525 = vadd.f32 %v1473, %v1509
        %v1526 = vadd.f32 %v1474, %v1510
        %v1527 = vadd.f32 %v1475, %v1511
        %v1528 = vadd.f32 %v1476, %v1512
        %v1529 = vadd.f32 %v1477, %v1513
        %v1530 = vadd.f32 %v1478, %v1514
        %v1531 = vadd.f32 %v1479, %v1515
        %v1532 = vadd.f32 %v1480, %v1516
        %v1533 = vadd.f32 %v1481, %v1517
        %v1534 = vadd.f32 %v1482, %v1518
        %v1535 = vadd.f32 %v1483, %v1519
        %v1536 = vld [vmem:[%s1431 + $0x9] sm:$0xff]
        %v1537 = vld [vmem:[%s1431 + $0x11] sm:$0xff]
        %v1538 = vld [vmem:[%s1431 + $0x29] sm:$0xff]
        %v1539 = vld [vmem:[%s1431 + $0x31] sm:$0xff]
        %v1540 = vld [vmem:[%s1431 + $0x49] sm:$0xff]
        %v1541 = vld [vmem:[%s1431 + $0x51] sm:$0xff]
        %v1542 = vld [vmem:[%s1431 + $0x69] sm:$0xff]
        %v1543 = vld [vmem:[%s1431 + $0x71] sm:$0xff]
        %v1544 = vld [vmem:[%s1431 + $0x89] sm:$0xff]
        %v1545 = vld [vmem:[%s1431 + $0x91] sm:$0xff]
        %v1546 = vld [vmem:[%s1431 + $0xa9] sm:$0xff]
        %v1547 = vld [vmem:[%s1431 + $0xb1] sm:$0xff]
        %v1548 = vld [vmem:[%s1431 + $0xc9] sm:$0xff]
        %v1549 = vld [vmem:[%s1431 + $0xd1] sm:$0xff]
        %v1550 = vld [vmem:[%s1431 + $0xe9] sm:$0xff]
        %v1551 = vld [vmem:[%s1431 + $0xf1] sm:$0xff]
        %v1552 = vlaneseq
        %v1553 = vshrl.u32 %v1552, 7
        %v1554 = vsub.s32 2, %v1553
        %v1555 = vrot.slane %v1118, %v1554
        %v1556 = vmul.f32 %v1536, %v1555
        %v1557 = vmul.f32 %v1537, %v1555
        %v1558 = vmul.f32 %v1538, %v1555
        %v1559 = vmul.f32 %v1539, %v1555
        %v1560 = vmul.f32 %v1540, %v1555
        %v1561 = vmul.f32 %v1541, %v1555
        %v1562 = vmul.f32 %v1542, %v1555
        %v1563 = vmul.f32 %v1543, %v1555
        %v1564 = vmul.f32 %v1544, %v1555
        %v1565 = vmul.f32 %v1545, %v1555
        %v1566 = vmul.f32 %v1546, %v1555
        %v1567 = vmul.f32 %v1547, %v1555
        %v1568 = vmul.f32 %v1548, %v1555
        %v1569 = vmul.f32 %v1549, %v1555
        %v1570 = vmul.f32 %v1550, %v1555
        %v1571 = vmul.f32 %v1551, %v1555
        %v1572 = vadd.f32 %v1520, %v1556
        %v1573 = vadd.f32 %v1521, %v1557
        %v1574 = vadd.f32 %v1522, %v1558
        %v1575 = vadd.f32 %v1523, %v1559
        %v1576 = vadd.f32 %v1524, %v1560
        %v1577 = vadd.f32 %v1525, %v1561
        %v1578 = vadd.f32 %v1526, %v1562
        %v1579 = vadd.f32 %v1527, %v1563
        %v1580 = vadd.f32 %v1528, %v1564
        %v1581 = vadd.f32 %v1529, %v1565
        %v1582 = vadd.f32 %v1530, %v1566
        %v1583 = vadd.f32 %v1531, %v1567
        %v1584 = vadd.f32 %v1532, %v1568
        %v1585 = vadd.f32 %v1533, %v1569
        %v1586 = vadd.f32 %v1534, %v1570
        %v1587 = vadd.f32 %v1535, %v1571
        %s1588 = scalar_lea.vmem [#allocation4], 128
        %v1589 = vld [vmem:[%s1588] sm:$0xff]
        %v1590 = vld [vmem:[%s1588 + $0x8] sm:$0xff]
        %v1591 = vld [vmem:[%s1588 + $0x10] sm:$0xff]
        %v1592 = vld [vmem:[%s1588 + $0x18] sm:$0xff]
        %v1593 = vld [vmem:[%s1588 + $0x20] sm:$0xff]
        %v1594 = vld [vmem:[%s1588 + $0x28] sm:$0xff]
        %v1595 = vld [vmem:[%s1588 + $0x30] sm:$0xff]
        %v1596 = vld [vmem:[%s1588 + $0x38] sm:$0xff]
        %v1597 = vld [vmem:[%s1588 + $0x40] sm:$0xff]
        %v1598 = vld [vmem:[%s1588 + $0x48] sm:$0xff]
        %v1599 = vld [vmem:[%s1588 + $0x50] sm:$0xff]
        %v1600 = vld [vmem:[%s1588 + $0x58] sm:$0xff]
        %v1601 = vld [vmem:[%s1588 + $0x60] sm:$0xff]
        %v1602 = vld [vmem:[%s1588 + $0x68] sm:$0xff]
        %v1603 = vld [vmem:[%s1588 + $0x70] sm:$0xff]
        %v1604 = vld [vmem:[%s1588 + $0x78] sm:$0xff]
        %s1605 = scalar_lea.vmem %s3, 1
        %v1606 = vld [vmem:[%s1605] sm:$0x1]
        %v1608 = vlaneseq
        %v1609 = vshrl.u32 %v1608, 7
        %v1610 = vsub.s32 0, %v1609
        %v1611 = vrot.slane %v1606, %v1610
        %1613 = vmatprep.subr.mxu0 0.0
        %1614 = vmatpush1.msra.mxu0 %v1604
        %1615 = vmatprep.subr.mxu0 0.0
        %1616 = vmatpush1.msra.mxu0 %v1603
        %1617 = vmatprep.subr.mxu0 0.0
        %1618 = vmatpush1.msra.mxu0 %v1602
        %1619 = vmatprep.subr.mxu0 0.0
        %1620 = vmatpush1.msra.mxu0 %v1601
        %1621 = vmatprep.subr.mxu0 0.0
        %1622 = vmatpush1.msra.mxu0 %v1600
        %1623 = vmatprep.subr.mxu0 0.0
        %1624 = vmatpush1.msra.mxu0 %v1599
        %1625 = vmatprep.subr.mxu0 0.0
        %1626 = vmatpush1.msra.mxu0 %v1598
        %1627 = vmatprep.subr.mxu0 0.0
        %1628 = vmatpush1.msra.mxu0 %v1597
        %1629 = vmatprep.subr.mxu0 0.0
        %1630 = vmatpush1.msra.mxu0 %v1596
        %1631 = vmatprep.subr.mxu0 0.0
        %1632 = vmatpush1.msra.mxu0 %v1595
        %1633 = vmatprep.subr.mxu0 0.0
        %1634 = vmatpush1.msra.mxu0 %v1594
        %1635 = vmatprep.subr.mxu0 0.0
        %1636 = vmatpush1.msra.mxu0 %v1593
        %1637 = vmatprep.subr.mxu0 0.0
        %1638 = vmatpush1.msra.mxu0 %v1592
        %1639 = vmatprep.subr.mxu0 0.0
        %1640 = vmatpush1.msra.mxu0 %v1591
        %1641 = vmatprep.subr.mxu0 0.0
        %1642 = vmatpush1.msra.mxu0 %v1590
        %1643 = vmatprep.subr.mxu0 0.0
        %1644 = vmatpush1.msra.mxu0 %v1589
        %1645 = vmatprep.subr.mxu0 0.0
        %1646 = vmatpush2.msra.mxu0 0.0
        %1647 = vmatprep.subr.mxu0 0.0
        %1648 = vmatpush2.msra.mxu0 0.0
        %1649 = vmatprep.subr.mxu0 0.0
        %1650 = vmatpush2.msra.mxu0 0.0
        %1651 = vmatprep.subr.mxu0 0.0
        %1652 = vmatpush2.msra.mxu0 0.0
        %1653 = vmatprep.subr.mxu0 0.0
        %1654 = vmatpush2.msra.mxu0 0.0
        %1655 = vmatprep.subr.mxu0 0.0
        %1656 = vmatpush2.msra.mxu0 0.0
        %1657 = vmatprep.subr.mxu0 0.0
        %1658 = vmatpush2.msra.mxu0 0.0
        %1659 = vmatprep.subr.mxu0 0.0
        %1660 = vmatpush2.msra.mxu0 0.0
        %1661 = vmatprep.subr.mxu0 0.0
        %1662 = vmatpush2.msra.mxu0 0.0
        %1663 = vmatprep.subr.mxu0 0.0
        %1664 = vmatpush2.msra.mxu0 0.0
        %1665 = vmatprep.subr.mxu0 0.0
        %1666 = vmatpush2.msra.mxu0 0.0
        %1667 = vmatprep.subr.mxu0 0.0
        %1668 = vmatpush2.msra.mxu0 0.0
        %1669 = vmatprep.subr.mxu0 0.0
        %1670 = vmatpush2.msra.mxu0 0.0
        %1671 = vmatprep.subr.mxu0 0.0
        %1672 = vmatpush2.msra.mxu0 0.0
        %1673 = vmatprep.subr.mxu0 0.0
        %1674 = vmatpush2.msra.mxu0 0.0
        %1675 = vmatprep.subr.mxu0 0.0
        %1676 = vmatpush2.msra.mxu0 0.0
        %1677 = vmatprep.mubr.f32.mxu0 0.0
        %1678 = vmatmul.mubr.f32.gmra.mxu0 %v1572
        %v1679 = vpop.f32.mrf.mxu0
        %v1680 = vadd.f32 %v1611, %v1679
        %v1681 = vpop.f32.mrf.mxu0
        %1682 = vmatprep.mubr.f32.mxu0 0.0
        %1683 = vmatmul.mubr.f32.gmra.mxu0 %v1573
        %v1684 = vpop.f32.mrf.mxu0
        %v1685 = vadd.f32 %v1611, %v1684
        %v1686 = vpop.f32.mrf.mxu0
        %1687 = vmatprep.mubr.f32.mxu0 0.0
        %1688 = vmatmul.mubr.f32.gmra.mxu0 %v1574
        %v1689 = vpop.f32.mrf.mxu0
        %v1690 = vadd.f32 %v1611, %v1689
        %v1691 = vpop.f32.mrf.mxu0
        %1692 = vmatprep.mubr.f32.mxu0 0.0
        %1693 = vmatmul.mubr.f32.gmra.mxu0 %v1575
        %v1694 = vpop.f32.mrf.mxu0
        %v1695 = vadd.f32 %v1611, %v1694
        %v1696 = vpop.f32.mrf.mxu0
        %1697 = vmatprep.mubr.f32.mxu0 0.0
        %1698 = vmatmul.mubr.f32.gmra.mxu0 %v1576
        %v1699 = vpop.f32.mrf.mxu0
        %v1700 = vadd.f32 %v1611, %v1699
        %v1701 = vpop.f32.mrf.mxu0
        %1702 = vmatprep.mubr.f32.mxu0 0.0
        %1703 = vmatmul.mubr.f32.gmra.mxu0 %v1577
        %v1704 = vpop.f32.mrf.mxu0
        %v1705 = vadd.f32 %v1611, %v1704
        %v1706 = vpop.f32.mrf.mxu0
        %1707 = vmatprep.mubr.f32.mxu0 0.0
        %1708 = vmatmul.mubr.f32.gmra.mxu0 %v1578
        %v1709 = vpop.f32.mrf.mxu0
        %v1710 = vadd.f32 %v1611, %v1709
        %v1711 = vpop.f32.mrf.mxu0
        %1712 = vmatprep.mubr.f32.mxu0 0.0
        %1713 = vmatmul.mubr.f32.gmra.mxu0 %v1579
        %v1714 = vpop.f32.mrf.mxu0
        %v1715 = vadd.f32 %v1611, %v1714
        %v1716 = vpop.f32.mrf.mxu0
        %1717 = vmatprep.mubr.f32.mxu0 0.0
        %1718 = vmatmul.mubr.f32.gmra.mxu0 %v1580
        %v1719 = vpop.f32.mrf.mxu0
        %v1720 = vadd.f32 %v1611, %v1719
        %v1721 = vpop.f32.mrf.mxu0
        %1722 = vmatprep.mubr.f32.mxu0 0.0
        %1723 = vmatmul.mubr.f32.gmra.mxu0 %v1581
        %v1724 = vpop.f32.mrf.mxu0
        %v1725 = vadd.f32 %v1611, %v1724
        %v1726 = vpop.f32.mrf.mxu0
        %1727 = vmatprep.mubr.f32.mxu0 0.0
        %1728 = vmatmul.mubr.f32.gmra.mxu0 %v1582
        %v1729 = vpop.f32.mrf.mxu0
        %v1730 = vadd.f32 %v1611, %v1729
        %v1731 = vpop.f32.mrf.mxu0
        %1732 = vmatprep.mubr.f32.mxu0 0.0
        %1733 = vmatmul.mubr.f32.gmra.mxu0 %v1583
        %v1734 = vpop.f32.mrf.mxu0
        %v1735 = vadd.f32 %v1611, %v1734
        %v1736 = vpop.f32.mrf.mxu0
        %1737 = vmatprep.mubr.f32.mxu0 0.0
        %1738 = vmatmul.mubr.f32.gmra.mxu0 %v1584
        %v1739 = vpop.f32.mrf.mxu0
        %v1740 = vadd.f32 %v1611, %v1739
        %v1741 = vpop.f32.mrf.mxu0
        %1742 = vmatprep.mubr.f32.mxu0 0.0
        %1743 = vmatmul.mubr.f32.gmra.mxu0 %v1585
        %v1744 = vpop.f32.mrf.mxu0
        %v1745 = vadd.f32 %v1611, %v1744
        %v1746 = vpop.f32.mrf.mxu0
        %1747 = vmatprep.mubr.f32.mxu0 0.0
        %1748 = vmatmul.mubr.f32.gmra.mxu0 %v1586
        %v1749 = vpop.f32.mrf.mxu0
        %v1750 = vadd.f32 %v1611, %v1749
        %v1751 = vpop.f32.mrf.mxu0
        %1752 = vmatprep.mubr.f32.mxu0 0.0
        %1753 = vmatmul.mubr.f32.gmra.mxu0 %v1587
        %v1754 = vpop.f32.mrf.mxu0
        %v1755 = vadd.f32 %v1611, %v1754
        %v1756 = vpop.f32.mrf.mxu0
        %1757 = vdwg.mxu0
        %v1758 = vld [vmem:[%s226] sm:$0xff]
        %v1759 = vld [vmem:[%s226 + $0x8] sm:$0xff]
        %v1760 = vld [vmem:[%s226 + $0x10] sm:$0xff]
        %v1761 = vld [vmem:[%s226 + $0x18] sm:$0xff]
        %v1762 = vld [vmem:[%s226 + $0x20] sm:$0xff]
        %v1763 = vld [vmem:[%s226 + $0x28] sm:$0xff]
        %v1764 = vld [vmem:[%s226 + $0x30] sm:$0xff]
        %v1765 = vld [vmem:[%s226 + $0x38] sm:$0xff]
        %v1766 = vld [vmem:[%s226 + $0x40] sm:$0xff]
        %v1767 = vld [vmem:[%s226 + $0x48] sm:$0xff]
        %v1768 = vld [vmem:[%s226 + $0x50] sm:$0xff]
        %v1769 = vld [vmem:[%s226 + $0x58] sm:$0xff]
        %v1770 = vld [vmem:[%s226 + $0x60] sm:$0xff]
        %v1771 = vld [vmem:[%s226 + $0x68] sm:$0xff]
        %v1772 = vld [vmem:[%s226 + $0x70] sm:$0xff]
        %v1773 = vld [vmem:[%s226 + $0x78] sm:$0xff]
        %v1774 = vadd.f32 %v1680, %v1758
        %v1775 = vadd.f32 %v1685, %v1759
        %v1776 = vadd.f32 %v1690, %v1760
        %v1777 = vadd.f32 %v1695, %v1761
        %v1778 = vadd.f32 %v1700, %v1762
        %v1779 = vadd.f32 %v1705, %v1763
        %v1780 = vadd.f32 %v1710, %v1764
        %v1781 = vadd.f32 %v1715, %v1765
        %v1782 = vadd.f32 %v1720, %v1766
        %v1783 = vadd.f32 %v1725, %v1767
        %v1784 = vadd.f32 %v1730, %v1768
        %v1785 = vadd.f32 %v1735, %v1769
        %v1786 = vadd.f32 %v1740, %v1770
        %v1787 = vadd.f32 %v1745, %v1771
        %v1788 = vadd.f32 %v1750, %v1772
        %v1789 = vadd.f32 %v1755, %v1773
        %v1790 = vmax.f32 %v1774, 0.0
        %v1791 = vmax.f32 %v1775, 0.0
        %v1792 = vmax.f32 %v1776, 0.0
        %v1793 = vmax.f32 %v1777, 0.0
        %v1794 = vmax.f32 %v1778, 0.0
        %v1795 = vmax.f32 %v1779, 0.0
        %v1796 = vmax.f32 %v1780, 0.0
        %v1797 = vmax.f32 %v1781, 0.0
        %v1798 = vmax.f32 %v1782, 0.0
        %v1799 = vmax.f32 %v1783, 0.0
        %v1800 = vmax.f32 %v1784, 0.0
        %v1801 = vmax.f32 %v1785, 0.0
        %v1802 = vmax.f32 %v1786, 0.0
        %v1803 = vmax.f32 %v1787, 0.0
        %v1804 = vmax.f32 %v1788, 0.0
        %v1805 = vmax.f32 %v1789, 0.0
        %1806 = vst [vmem:[%s250] sm:$0xff] %v1790
        %1807 = vst [vmem:[%s250 + $0x8] sm:$0xff] %v1791
        %1808 = vst [vmem:[%s250 + $0x10] sm:$0xff] %v1792
        %1809 = vst [vmem:[%s250 + $0x18] sm:$0xff] %v1793
        %1810 = vst [vmem:[%s250 + $0x20] sm:$0xff] %v1794
        %1811 = vst [vmem:[%s250 + $0x28] sm:$0xff] %v1795
        %1812 = vst [vmem:[%s250 + $0x30] sm:$0xff] %v1796
        %1813 = vst [vmem:[%s250 + $0x38] sm:$0xff] %v1797
        %1814 = vst [vmem:[%s250 + $0x40] sm:$0xff] %v1798
        %1815 = vst [vmem:[%s250 + $0x48] sm:$0xff] %v1799
        %1816 = vst [vmem:[%s250 + $0x50] sm:$0xff] %v1800
        %1817 = vst [vmem:[%s250 + $0x58] sm:$0xff] %v1801
        %1818 = vst [vmem:[%s250 + $0x60] sm:$0xff] %v1802
        %1819 = vst [vmem:[%s250 + $0x68] sm:$0xff] %v1803
        %1820 = vst [vmem:[%s250 + $0x70] sm:$0xff] %v1804
        %1821 = vst [vmem:[%s250 + $0x78] sm:$0xff] %v1805
        %s1822 = sand.u32 %s136, 1
        %s1823 = scalar_lea.sflag [#allocation6], %s1822
        %s1824 = sand.u32 %s136, 1
        %s1825 = smul.addr %s1824, 128
        %s1826 = scalar_lea.vmem [#allocation9], %s1825
        // Predicated region
        $region53: #{tpu_custom_call.1} parent=35 // pred_check
          %p1827 = pneg %p146
        $region54: #{tpu_custom_call.1} parent=35 // pred_check_branch
          %1829 = sbr.rel (%p1827) target = $region56
        $region55: #{tpu_custom_call.1} parent=35 // pred_region
          %s1830 = smul.u32 8, %s28
          %s1832 = ssub.s32 2048, 2048
          %1833 = vsyncadd %s1823, %s1832
          %s1834 = smul.addr %s1830, 2
          %s1835 = smul.addr %s27, 32
          %s1836 = sadd.s32 %s1834, %s1835
          %s1837 = smul.addr %s1836, 128
          %s1838 = scalar_lea.hbm %s5, %s1837
          %s1839 = sshll.u32 %s1826, 4
          %s1840 = int_to_ptr.vmem [resolvable:$true] %s1839
          %1845 = dma.vmem_to_hbm [thread:$0]  %s1840, 2048, %s1838, %s1823, 128, 128, 8
        $region56: #{tpu_custom_call.1} parent=35 // pred_fallthru
          _
      $region36: #{tpu_custom_call.1} parent=5 // pred_fallthru
        _
      %p1846 = scmp.le.s32.totalorder 2, %s18
      // Predicated region
      $region57: #{tpu_custom_call.1} parent=5 // pred_check
        %p1847 = pneg %p1846
      $region58: #{tpu_custom_call.1} parent=5 // pred_check_branch
        %1849 = sbr.rel (%p1847) target = $region60
      $region59: #{tpu_custom_call.1} parent=5 // pred_region
        %s1850 = ssub.s32 %s18, 2
        // Predicated region
        $region61: #{tpu_custom_call.1} parent=59 // pred_check
          %p1851 = pneg %p152
        $region62: #{tpu_custom_call.1} parent=59 // pred_check_branch
          %1853 = sbr.rel (%p1851) target = $region64
        $region63: #{tpu_custom_call.1} parent=59 // pred_region
          %s1854 = sand.u32 %s137, 1
          %s1855 = scalar_lea.sflag [#allocation6], %s1854
          %s1856 = sand.u32 %s137, 1
          %s1857 = smul.addr %s1856, 128
          %s1858 = scalar_lea.vmem [#allocation9], %s1857
          %1859 = dma.done %s1855, 2048
        $region64: #{tpu_custom_call.1} parent=59 // pred_fallthru
          _
      $region60: #{tpu_custom_call.1} parent=5 // pred_fallthru
        _
    $region6: #{tpu_custom_call.1} parent=1 // loop_footer
      %s22 = sadd.s32 1, %s18
    $region7: #{tpu_custom_call.1} parent=1 // loop_footer_branch
      %17 = sbr.rel target = $region3
    $region8: #{tpu_custom_call.1} parent=1 // loop_exit
      _
    %1860 = vsyncpa [#allocation5], 1
    %s1861 = scalar_lea.sflag [#allocation5], 1
    %1862 = vsyncpa %s1861, 1
    %1863 = vsyncpa [#allocation8], 1
    %s1864 = scalar_lea.sflag [#allocation8], 1
    %1865 = vsyncpa %s1864, 1
    %1866 = vsyncpa [#allocation6], 1
    %s1867 = scalar_lea.sflag [#allocation6], 1
    %1868 = vsyncpa %s1867, 1
  %1869 = vsyncmov [#allocation3]
  %s1870 = vpop.sfrf %1869
  %p1871 = scmp.eq.s32.totalorder %s1870, 0
  %p1872 = pneg %p1871
  %1874 = shalt.err (%p1872)

</llo_original>
